<compile_context>
chip_gen: v5e
topology: v5e:2x2
jax: 0.10.0
libtpu: 0.0.40
codegen_flags: <defaults>
</compile_context>

<pallas_src>
import functools

import numpy as np
import jax
import jax.numpy as jnp
from jax.experimental import pallas as pl
from jax.experimental.pallas import tpu as pltpu


# ----------------------------------------------------------------------------
# Static shapes (small, consistent with the module)
# ----------------------------------------------------------------------------
B, C_IN, H, W = 2, 4, 16, 16
C1, C2 = 16, 32                          # encoder conv channels
KH = KW = 3
STRIDE, PAD = 2, 1
WP = W + 2 * PAD                         # 18 (padded input width)
H1 = (H + 2 * PAD - KH) // STRIDE + 1    # 8
W1 = (W + 2 * PAD - KW) // STRIDE + 1    # 8
H2 = (H1 + 2 * PAD - KH) // STRIDE + 1   # 4
W2 = (W1 + 2 * PAD - KW) // STRIDE + 1   # 4
K1 = KH * WP * C_IN                      # 216 conv1 Toeplitz contraction
K1_PAD = 256                             # padded to 2 lane groups
FLAT1 = H1 * W1 * C1                     # 1024 flattened h1 (NHWC)
FEAT = H2 * W2 * C2                      # 512 flattened feature (NHWC)
RNN = 32                                 # rnn_out
NA = 6                                   # discrete action count
PACK = 128                               # packed, lane-dense output width


def _vmem():
    return pl.BlockSpec(memory_space=pltpu.MemorySpace.VMEM)


# ----------------------------------------------------------------------------
# Fused kernel: conv1 -> conv2 -> LSTMCell -> critic/actor -> softmax/entropy
# All matmuls are lane-dense; no gathers, masks or reshapes.
# ----------------------------------------------------------------------------
def _a3c_kernel(p1_ref, state_ref, w1_ref, w2_ref, wih_ref, wsm_ref, bias_ref,
                out_ref):
    f32 = jnp.float32
    bf16 = jnp.bfloat16

    bias = bias_ref[...]                                    # (4, 512) f32
    wsm = wsm_ref[...]                                      # (64, 128) bf16
    state = state_ref[...]                                  # (B, 64) f32

    # ---- conv1: block-Toeplitz matmul, lane-dense output -------------------
    # rows = oh*B + b, cols = ow*C1 + c1
    h1 = jnp.dot(p1_ref[...], w1_ref[...], preferred_element_type=f32)
    h1 = jnp.maximum(h1 + bias[0:1, 0:W1 * C1], 0.0)        # (16, 128)

    # ---- NHWC flatten: (16,128) -> (B, 1024) via 8 contiguous row slices ----
    h1_flat = jnp.concatenate(
        [h1[oh * B:(oh + 1) * B, :] for oh in range(H1)], axis=1
    ).astype(bf16)                                          # (B, 1024)

    # ---- conv2: precomposed dense weight, single wide matmul ----------------
    h2 = jnp.dot(h1_flat, w2_ref[...], preferred_element_type=f32)
    h2 = jnp.maximum(h2 + bias[1:2, :], 0.0)                # (B, 512)

    # ---- LSTMCell -----------------------------------------------------------
    hx = state[:, 0:RNN]
    cx = state[:, RNN:2 * RNN]
    gates = jnp.dot(h2.astype(bf16), wih_ref[...], preferred_element_type=f32)
    gates = gates + jnp.dot(hx.astype(bf16), wsm[0:RNN, :],
                            preferred_element_type=f32)
    gates = gates + bias[2:3, 0:4 * RNN]                    # (B, 128)

    # gate nonlinearities on the full 128-lane vector (EUP); gate order i,f,g,o
    sg = 0.5 * (jnp.tanh(0.5 * gates) + 1.0)                # stable sigmoid
    tg = jnp.tanh(gates)
    i_g = sg[:, 0 * RNN:1 * RNN]
    f_g = sg[:, 1 * RNN:2 * RNN]
    g_g = tg[:, 2 * RNN:3 * RNN]
    o_g = sg[:, 3 * RNN:4 * RNN]

    c_new = f_g * cx + i_g * g_g
    h_new = o_g * jnp.tanh(c_new)

    # ---- actor + critic in a single 128-lane matmul -------------------------
    head = jnp.dot(h_new.astype(bf16), wsm[RNN:2 * RNN, :],
                   preferred_element_type=f32)
    head = head + bias[3:4, 0:PACK]                         # (B, 128)
    logits = head[:, 0:NA]
    value = head[:, NA:NA + 1]

    # softmax / log_softmax / entropy (exact division: probs sum to 1)
    m = jnp.max(logits, axis=1, keepdims=True)
    zl = logits - m
    e = jnp.exp(zl)
    s = jnp.sum(e, axis=1, keepdims=True)
    logp = zl - jnp.log(s)
    probs = e / s
    ent = -jnp.sum(probs * logp, axis=1, keepdims=True)

    # ---- single lane-dense packed store --------------------------------------
    pad = jnp.zeros((B, PACK - (2 * RNN + 2 * NA + 2)), f32)
    out_ref[...] = jnp.concatenate(
        [h_new, c_new, probs, logp, value, ent, pad], axis=1)


# ----------------------------------------------------------------------------
# Input prep (glue on the raw observation only; intermediates never leave VMEM)
# Row r = oh*B + b, column k = (dh*WP + iw_padded)*C_IN + c_in.
# ----------------------------------------------------------------------------
def _prep_conv1_patches(x):
    xp = jnp.pad(x, ((0, 0), (0, 0), (PAD, PAD), (PAD, PAD)))   # (B,C,18,18)
    xp = jnp.transpose(xp, (0, 2, 3, 1))                        # (B,18,18,C)
    rows = [xp[:, dh:dh + STRIDE * H1:STRIDE, :, :] for dh in range(KH)]
    p = jnp.stack(rows, axis=2)                                 # (B,H1,KH,WP,C)
    p = jnp.transpose(p, (1, 0, 2, 3, 4)).reshape(H1 * B, K1)   # (16, 216)
    p = jnp.pad(p, ((0, 0), (0, K1_PAD - K1)))
    return p.astype(jnp.bfloat16)


# ----------------------------------------------------------------------------
# Parameter init (mirrors module __init__) + one-time packing into slabs
# ----------------------------------------------------------------------------
def _norm_col_init(key, out_dim, in_dim, std=1.0):
    x = jax.random.normal(key, (out_dim, in_dim), jnp.float32)
    return x * std / jnp.sqrt(jnp.sum(x * x, axis=1, keepdims=True))


def _bf16_round(x):
    return x.astype(jnp.bfloat16).astype(jnp.float32)


def init_params(key):
    ks = jax.random.split(key, 6)
    bound = 1.0 / np.sqrt(RNN)
    conv1_w = _bf16_round(jax.random.normal(ks[0], (C1, C_IN, KH, KW)) * 0.1)
    conv2_w = _bf16_round(jax.random.normal(ks[1], (C2, C1, KH, KW)) * 0.1)
    # LSTMCell (gate order i, f, g, o); biases filled with 0 as in the module
    w_ih = _bf16_round(jax.random.uniform(ks[2], (4 * RNN, FEAT),
                                          jnp.float32, -bound, bound))
    w_hh = _bf16_round(jax.random.uniform(ks[3], (4 * RNN, RNN),
                                          jnp.float32, -bound, bound))
    # actor / critic linears: norm_col_init(0.01), zero bias
    w_actor = _bf16_round(_norm_col_init(ks[4], NA, RNN, 0.01))
    w_critic = _bf16_round(_norm_col_init(ks[5], 1, RNN, 0.01))

    w1_np = np.asarray(conv1_w)
    w2_np = np.asarray(conv2_w)

    # conv1 block-Toeplitz-along-W weight (256, 128); entries are exact copies
    w1t = np.zeros((K1_PAD, W1 * C1), np.float32)
    for dh in range(KH):
        for ow in range(W1):
            for dw in range(KW):
                iw_p = STRIDE * ow + dw
                k = (dh * WP + iw_p) * C_IN
                w1t[k:k + C_IN, ow * C1:(ow + 1) * C1] = w1_np[:, :, dh, dw].T

    # conv2 precomposed dense weight (1024, 512); absorbs taps + zero padding
    w2d = np.zeros((FLAT1, FEAT), np.float32)
    for oh2 in range(H2):
        for ow2 in range(W2):
            col = (oh2 * W2 + ow2) * C2
            for dh in range(KH):
                for dw in range(KW):
                    ih = STRIDE * oh2 + dh - PAD
                    iw = STRIDE * ow2 + dw - PAD
                    if 0 <= ih < H1 and 0 <= iw < W1:
                        row = (ih * W1 + iw) * C1
                        w2d[row:row + C1, col:col + C2] = w2_np[:, :, dh, dw].T

    # small-weight slab (64, 128): rows 0:32 = whh^T, rows 32:64 = [actor|critic|0]
    wsmall = np.zeros((2 * RNN, 4 * RNN), np.float32)
    wsmall[0:RNN, :] = np.asarray(w_hh).T
    wsmall[RNN:2 * RNN, 0:NA] = np.asarray(w_actor).T
    wsmall[RNN:2 * RNN, NA:NA + 1] = np.asarray(w_critic).T

    # bias slab (4, 512): conv1 / conv2 / lstm-gates / head (all zero at init)
    bias = np.zeros((4, FEAT), np.float32)

    return {
        # originals kept for the pure-JAX reference check
        "conv1_w": conv1_w, "conv2_w": conv2_w,
        # kernel operands (packed once)
        "p_w1": jnp.asarray(w1t, jnp.bfloat16),             # (256, 128)
        "p_w2": jnp.asarray(w2d, jnp.bfloat16),             # (1024, 512)
        "p_wih": jnp.transpose(w_ih).astype(jnp.bfloat16),  # (512, 128)
        "p_wsm": jnp.asarray(wsmall, jnp.bfloat16),         # (64, 128)
        "p_bias": jnp.asarray(bias, jnp.float32),           # (4, 512)
    }


# ----------------------------------------------------------------------------
# A3C forward (head_name='cnn_lstm', discrete action space)
# ----------------------------------------------------------------------------
@functools.partial(jax.jit, static_argnames=("test",))
def a3c_forward(params, x, hx, cx, test=True, key=None):
    p1 = _prep_conv1_patches(x)
    state = jnp.concatenate([hx, cx], axis=1)               # (B, 64)

    packed = pl.pallas_call(
        _a3c_kernel,
        out_shape=jax.ShapeDtypeStruct((B, PACK), jnp.float32),
        in_specs=[_vmem()] * 7,
        out_specs=_vmem(),
    )(p1, state, params["p_w1"], params["p_w2"], params["p_wih"],
      params["p_wsm"], params["p_bias"])

    hx_new = packed[:, 0:RNN]
    cx_new = packed[:, RNN:2 * RNN]
    probs = packed[:, 2 * RNN:2 * RNN + NA]
    logp = packed[:, 2 * RNN + NA:2 * RNN + 2 * NA]
    value = packed[:, 2 * RNN + 2 * NA:2 * RNN + 2 * NA + 1]
    entropy = packed[:, 2 * RNN + 2 * NA + 1:2 * RNN + 2 * NA + 2]

    if test:
        action = jnp.argmax(probs, axis=1)                  # prob.max(1)[1]
        log_prob = logp                                     # full log_softmax
    else:
        # TODO(synk): torch's prob.multinomial(1) — stochastic sampling kept in
        # the JAX wrapper (jax.random.categorical), not in the kernel.
        action = jax.random.categorical(key, logp, axis=1)
        log_prob = jnp.take_along_axis(logp, action[:, None], axis=1)

    return value, action, entropy, log_prob, (hx_new, cx_new)


# ----------------------------------------------------------------------------
# Pure-JAX reference (loose numerical smoke check of the fused kernel)
# ----------------------------------------------------------------------------
def _reference_forward(params, x, hx, cx):
    dn = ("NCHW", "OIHW", "NCHW")
    h1 = jax.lax.conv_general_dilated(
        x, params["conv1_w"], (STRIDE, STRIDE), ((PAD, PAD), (PAD, PAD)),
        dimension_numbers=dn)
    h1 = jax.nn.relu(h1)
    h2 = jax.lax.conv_general_dilated(
        h1, params["conv2_w"], (STRIDE, STRIDE), ((PAD, PAD), (PAD, PAD)),
        dimension_numbers=dn)
    h2 = jax.nn.relu(h2)
    feat = jnp.transpose(h2, (0, 2, 3, 1)).reshape(B, FEAT)     # NHWC flatten
    wih = params["p_wih"].astype(jnp.float32)
    whh = params["p_wsm"][0:RNN].astype(jnp.float32)
    gates = feat @ wih + hx @ whh
    i, f, g, o = jnp.split(gates, 4, axis=1)
    i, f, o = jax.nn.sigmoid(i), jax.nn.sigmoid(f), jax.nn.sigmoid(o)
    g = jnp.tanh(g)
    c_new = f * cx + i * g
    h_new = o * jnp.tanh(c_new)
    whead = params["p_wsm"][RNN:2 * RNN].astype(jnp.float32)
    head = h_new @ whead
    logits, value = head[:, :NA], head[:, NA:NA + 1]
    logp = jax.nn.log_softmax(logits, axis=1)
    probs = jax.nn.softmax(logits, axis=1)
    ent = -jnp.sum(logp * probs, axis=1, keepdims=True)
    return value, logp, ent, h_new, c_new


if __name__ == "__main__":
    root = jax.random.PRNGKey(0)
    k_param, k_x = jax.random.split(root)
    params = init_params(k_param)

    x = jax.random.normal(k_x, (B, C_IN, H, W), jnp.float32)
    hx = jnp.zeros((B, RNN), jnp.float32)
    cx = jnp.zeros((B, RNN), jnp.float32)

    value, action, entropy, log_prob, (hx_new, cx_new) = a3c_forward(
        params, x, hx, cx, test=True)
    jax.block_until_ready((value, action, entropy, log_prob, hx_new, cx_new))

    # shape checks
    assert value.shape == (B, 1)
    assert action.shape == (B,)
    assert entropy.shape == (B, 1)
    assert log_prob.shape == (B, NA)
    assert hx_new.shape == (B, RNN) and cx_new.shape == (B, RNN)

    # loose numerical smoke check vs pure-JAX reference (bf16 MXU in the
    # kernel -> generous tolerances)
    r_val, r_logp, r_ent, r_h, r_c = _reference_forward(params, x, hx, cx)

    def _mad(a, b):
        return float(jnp.max(jnp.abs(a - b)))

    assert _mad(value, r_val) < 5e-2
    assert _mad(log_prob, r_logp) < 5e-2
    assert _mad(entropy, r_ent) < 5e-2
    assert _mad(hx_new, r_h) < 1.5e-1
    assert _mad(cx_new, r_c) < 1.5e-1
    assert bool(jnp.all(jnp.isfinite(value)))

    print("KERNEL_OK")
</pallas_src>

<mosaic_0001>
module attributes {stable_mosaic.version = 11 : i64} {
  func.func @_a3c_kernel(%arg0: memref<16x256xbf16, #tpu.memory_space<vmem>>, %arg1: memref<2x64xf32, #tpu.memory_space<vmem>>, %arg2: memref<256x128xbf16, #tpu.memory_space<vmem>>, %arg3: memref<1024x512xbf16, #tpu.memory_space<vmem>>, %arg4: memref<512x128xbf16, #tpu.memory_space<vmem>>, %arg5: memref<64x128xbf16, #tpu.memory_space<vmem>>, %arg6: memref<4x512xf32, #tpu.memory_space<vmem>>, %arg7: memref<2x128xf32, #tpu.memory_space<vmem>>) attributes {dimension_semantics = [], scalar_prefetch = 0 : i64, scratch_operands = 0 : i64, tpu.core_type = #tpu.core_type<tc>} {
    %c0 = arith.constant 0 : index
    %c0_0 = arith.constant 0 : index
    %0 = vector.load %arg6[%c0, %c0_0] : memref<4x512xf32, #tpu.memory_space<vmem>>, vector<4x512xf32>
    %c0_1 = arith.constant 0 : index
    %c0_2 = arith.constant 0 : index
    %1 = vector.load %arg5[%c0_1, %c0_2] : memref<64x128xbf16, #tpu.memory_space<vmem>>, vector<64x128xbf16>
    %c0_3 = arith.constant 0 : index
    %c0_4 = arith.constant 0 : index
    %2 = vector.load %arg1[%c0_3, %c0_4] : memref<2x64xf32, #tpu.memory_space<vmem>>, vector<2x64xf32>
    %c0_5 = arith.constant 0 : index
    %c0_6 = arith.constant 0 : index
    %3 = vector.load %arg0[%c0_5, %c0_6] : memref<16x256xbf16, #tpu.memory_space<vmem>>, vector<16x256xbf16>
    %c0_7 = arith.constant 0 : index
    %c0_8 = arith.constant 0 : index
    %4 = vector.load %arg2[%c0_7, %c0_8] : memref<256x128xbf16, #tpu.memory_space<vmem>>, vector<256x128xbf16>
    %cst = arith.constant dense<0.000000e+00> : vector<16x128xf32>
    %5 = tpu.matmul %3, %4, %cst {dimension_numbers = #tpu.dot_dimension_numbers<[1], [0], [0], [1], [0, 0, 1, 1], [], []>} : vector<16x256xbf16>, vector<256x128xbf16>, vector<16x128xf32> -> vector<16x128xf32>
    %6 = vector.extract_strided_slice %0 {offsets = [0, 0], sizes = [1, 128], strides = [1, 1]} : vector<4x512xf32> to vector<1x128xf32>
    %7 = vector.broadcast %6 : vector<1x128xf32> to vector<16x128xf32>
    %8 = arith.addf %5, %7 : vector<16x128xf32>
    %cst_9 = arith.constant 0.000000e+00 : f32
    %9 = vector.broadcast %cst_9 : f32 to vector<16x128xf32>
    %10 = arith.maximumf %8, %9 : vector<16x128xf32>
    %11 = vector.extract_strided_slice %10 {offsets = [0, 0], sizes = [2, 128], strides = [1, 1]} : vector<16x128xf32> to vector<2x128xf32>
    %12 = vector.extract_strided_slice %10 {offsets = [2, 0], sizes = [2, 128], strides = [1, 1]} : vector<16x128xf32> to vector<2x128xf32>
    %13 = vector.extract_strided_slice %10 {offsets = [4, 0], sizes = [2, 128], strides = [1, 1]} : vector<16x128xf32> to vector<2x128xf32>
    %14 = vector.extract_strided_slice %10 {offsets = [6, 0], sizes = [2, 128], strides = [1, 1]} : vector<16x128xf32> to vector<2x128xf32>
    %15 = vector.extract_strided_slice %10 {offsets = [8, 0], sizes = [2, 128], strides = [1, 1]} : vector<16x128xf32> to vector<2x128xf32>
    %16 = vector.extract_strided_slice %10 {offsets = [10, 0], sizes = [2, 128], strides = [1, 1]} : vector<16x128xf32> to vector<2x128xf32>
    %17 = vector.extract_strided_slice %10 {offsets = [12, 0], sizes = [2, 128], strides = [1, 1]} : vector<16x128xf32> to vector<2x128xf32>
    %18 = vector.extract_strided_slice %10 {offsets = [14, 0], sizes = [2, 128], strides = [1, 1]} : vector<16x128xf32> to vector<2x128xf32>
    %19 = tpu.concatenate %11, %12, %13, %14, %15, %16, %17, %18 in 1 : vector<2x128xf32>, vector<2x128xf32>, vector<2x128xf32>, vector<2x128xf32>, vector<2x128xf32>, vector<2x128xf32>, vector<2x128xf32>, vector<2x128xf32> -> vector<2x1024xf32>
    %20 = arith.truncf %19 : vector<2x1024xf32> to vector<2x1024xbf16>
    %c0_10 = arith.constant 0 : index
    %c0_11 = arith.constant 0 : index
    %21 = vector.load %arg3[%c0_10, %c0_11] : memref<1024x512xbf16, #tpu.memory_space<vmem>>, vector<1024x512xbf16>
    %cst_12 = arith.constant dense<0.000000e+00> : vector<2x512xf32>
    %22 = tpu.matmul %20, %21, %cst_12 {dimension_numbers = #tpu.dot_dimension_numbers<[1], [0], [0], [1], [0, 0, 1, 1], [], []>} : vector<2x1024xbf16>, vector<1024x512xbf16>, vector<2x512xf32> -> vector<2x512xf32>
    %23 = vector.extract_strided_slice %0 {offsets = [1, 0], sizes = [1, 512], strides = [1, 1]} : vector<4x512xf32> to vector<1x512xf32>
    %24 = vector.broadcast %23 : vector<1x512xf32> to vector<2x512xf32>
    %25 = arith.addf %22, %24 : vector<2x512xf32>
    %cst_13 = arith.constant 0.000000e+00 : f32
    %26 = vector.broadcast %cst_13 : f32 to vector<2x512xf32>
    %27 = arith.maximumf %25, %26 : vector<2x512xf32>
    %28 = vector.extract_strided_slice %2 {offsets = [0, 0], sizes = [2, 32], strides = [1, 1]} : vector<2x64xf32> to vector<2x32xf32>
    %29 = vector.extract_strided_slice %2 {offsets = [0, 32], sizes = [2, 32], strides = [1, 1]} : vector<2x64xf32> to vector<2x32xf32>
    %30 = arith.truncf %27 : vector<2x512xf32> to vector<2x512xbf16>
    %c0_14 = arith.constant 0 : index
    %c0_15 = arith.constant 0 : index
    %31 = vector.load %arg4[%c0_14, %c0_15] : memref<512x128xbf16, #tpu.memory_space<vmem>>, vector<512x128xbf16>
    %cst_16 = arith.constant dense<0.000000e+00> : vector<2x128xf32>
    %32 = tpu.matmul %30, %31, %cst_16 {dimension_numbers = #tpu.dot_dimension_numbers<[1], [0], [0], [1], [0, 0, 1, 1], [], []>} : vector<2x512xbf16>, vector<512x128xbf16>, vector<2x128xf32> -> vector<2x128xf32>
    %33 = arith.truncf %28 : vector<2x32xf32> to vector<2x32xbf16>
    %34 = vector.extract_strided_slice %1 {offsets = [0, 0], sizes = [32, 128], strides = [1, 1]} : vector<64x128xbf16> to vector<32x128xbf16>
    %cst_17 = arith.constant dense<0.000000e+00> : vector<2x128xf32>
    %35 = tpu.matmul %33, %34, %cst_17 {dimension_numbers = #tpu.dot_dimension_numbers<[1], [0], [0], [1], [0, 0, 1, 1], [], []>} : vector<2x32xbf16>, vector<32x128xbf16>, vector<2x128xf32> -> vector<2x128xf32>
    %36 = arith.addf %32, %35 : vector<2x128xf32>
    %37 = vector.extract_strided_slice %0 {offsets = [2, 0], sizes = [1, 128], strides = [1, 1]} : vector<4x512xf32> to vector<1x128xf32>
    %38 = vector.broadcast %37 : vector<1x128xf32> to vector<2x128xf32>
    %39 = arith.addf %36, %38 : vector<2x128xf32>
    %cst_18 = arith.constant 5.000000e-01 : f32
    %40 = vector.broadcast %cst_18 : f32 to vector<2x128xf32>
    %41 = arith.mulf %40, %39 : vector<2x128xf32>
    %42 = math.tanh %41 : vector<2x128xf32>
    %cst_19 = arith.constant 1.000000e+00 : f32
    %43 = vector.broadcast %cst_19 : f32 to vector<2x128xf32>
    %44 = arith.addf %42, %43 : vector<2x128xf32>
    %cst_20 = arith.constant 5.000000e-01 : f32
    %45 = vector.broadcast %cst_20 : f32 to vector<2x128xf32>
    %46 = arith.mulf %45, %44 : vector<2x128xf32>
    %47 = math.tanh %39 : vector<2x128xf32>
    %48 = vector.extract_strided_slice %46 {offsets = [0, 0], sizes = [2, 32], strides = [1, 1]} : vector<2x128xf32> to vector<2x32xf32>
    %49 = vector.extract_strided_slice %46 {offsets = [0, 32], sizes = [2, 32], strides = [1, 1]} : vector<2x128xf32> to vector<2x32xf32>
    %50 = vector.extract_strided_slice %47 {offsets = [0, 64], sizes = [2, 32], strides = [1, 1]} : vector<2x128xf32> to vector<2x32xf32>
    %51 = vector.extract_strided_slice %46 {offsets = [0, 96], sizes = [2, 32], strides = [1, 1]} : vector<2x128xf32> to vector<2x32xf32>
    %52 = arith.mulf %49, %29 : vector<2x32xf32>
    %53 = arith.mulf %48, %50 : vector<2x32xf32>
    %54 = arith.addf %52, %53 : vector<2x32xf32>
    %55 = math.tanh %54 : vector<2x32xf32>
    %56 = arith.mulf %51, %55 : vector<2x32xf32>
    %57 = arith.truncf %56 : vector<2x32xf32> to vector<2x32xbf16>
    %58 = vector.extract_strided_slice %1 {offsets = [32, 0], sizes = [32, 128], strides = [1, 1]} : vector<64x128xbf16> to vector<32x128xbf16>
    %cst_21 = arith.constant dense<0.000000e+00> : vector<2x128xf32>
    %59 = tpu.matmul %57, %58, %cst_21 {dimension_numbers = #tpu.dot_dimension_numbers<[1], [0], [0], [1], [0, 0, 1, 1], [], []>} : vector<2x32xbf16>, vector<32x128xbf16>, vector<2x128xf32> -> vector<2x128xf32>
    %60 = vector.extract_strided_slice %0 {offsets = [3, 0], sizes = [1, 128], strides = [1, 1]} : vector<4x512xf32> to vector<1x128xf32>
    %61 = vector.broadcast %60 : vector<1x128xf32> to vector<2x128xf32>
    %62 = arith.addf %59, %61 : vector<2x128xf32>
    %63 = vector.extract_strided_slice %62 {offsets = [0, 0], sizes = [2, 6], strides = [1, 1]} : vector<2x128xf32> to vector<2x6xf32>
    %64 = vector.extract_strided_slice %62 {offsets = [0, 6], sizes = [2, 1], strides = [1, 1]} : vector<2x128xf32> to vector<2x1xf32>
    %cst_22 = arith.constant dense<0xFF800000> : vector<2xf32>
    %65 = vector.multi_reduction <maximumf>, %63, %cst_22 [1] : vector<2x6xf32> to vector<2xf32>
    %66 = vector.shape_cast %65 : vector<2xf32> to vector<2x1xf32>
    %67 = vector.broadcast %66 : vector<2x1xf32> to vector<2x6xf32>
    %68 = arith.subf %63, %67 : vector<2x6xf32>
    %69 = math.exp %68 : vector<2x6xf32>
    %cst_23 = arith.constant dense<0.000000e+00> : vector<2xf32>
    %70 = vector.multi_reduction <add>, %69, %cst_23 [1] : vector<2x6xf32> to vector<2xf32>
    %71 = vector.shape_cast %70 : vector<2xf32> to vector<2x1xf32>
    %72 = math.log %71 : vector<2x1xf32>
    %73 = vector.broadcast %72 : vector<2x1xf32> to vector<2x6xf32>
    %74 = arith.subf %68, %73 : vector<2x6xf32>
    %75 = vector.broadcast %71 : vector<2x1xf32> to vector<2x6xf32>
    %76 = arith.divf %69, %75 : vector<2x6xf32>
    %77 = arith.mulf %76, %74 : vector<2x6xf32>
    %cst_24 = arith.constant dense<0.000000e+00> : vector<2xf32>
    %78 = vector.multi_reduction <add>, %77, %cst_24 [1] : vector<2x6xf32> to vector<2xf32>
    %79 = vector.shape_cast %78 : vector<2xf32> to vector<2x1xf32>
    %cst_25 = arith.constant 0.000000e+00 : f32
    %80 = vector.broadcast %cst_25 : f32 to vector<2x1xf32>
    %81 = arith.subf %80, %79 : vector<2x1xf32>
    %cst_26 = arith.constant 0.000000e+00 : f32
    %82 = vector.broadcast %cst_26 : f32 to vector<2x50xf32>
    %83 = tpu.concatenate %56, %54, %76, %74, %64, %81, %82 in 1 : vector<2x32xf32>, vector<2x32xf32>, vector<2x6xf32>, vector<2x6xf32>, vector<2x1xf32>, vector<2x1xf32>, vector<2x50xf32> -> vector<2x128xf32>
    %c0_27 = arith.constant 0 : index
    %c0_28 = arith.constant 0 : index
    %84 = vector.load %arg7[%c0_27, %c0_28] : memref<2x128xf32, #tpu.memory_space<vmem>>, vector<2x128xf32>
    tpu.vector_store %arg7[%c0_27, %c0_28], %83 {strides = array<i32>} : memref<2x128xf32, #tpu.memory_space<vmem>>, vector<2x128xf32>,
    return
  }
}

</mosaic_0001>

<llo_original>
// kernel: a3c_forward.1
$region0: #{a3c_forward.1}
  #allocation0 [shape = 'u32[]', space=smem, size = 0x4, offset = 0x4, fixed_abs, tag = 'smem constant byte address 0x4 - core index']
  #allocation1 [shape = 'u32[72,128]{1,0:T(1,128)}', space=vmem, size = 0x9000, scoped, tag = 'internal scratch']
  %s0 = inlined_call_operand.vmem [shape: bf16[16,256], index: 0, kind: input, shape index: {}]
  %s1 = inlined_call_operand.vmem [shape: f32[2,64], index: 1, kind: input, shape index: {}]
  %s2 = inlined_call_operand.vmem [shape: bf16[256,128], index: 2, kind: input, shape index: {}]
  %s3 = inlined_call_operand.hbm [shape: bf16[1024,512], index: 3, kind: input, shape index: {}]
  %s4 = inlined_call_operand.vmem [shape: bf16[512,128], index: 4, kind: input, shape index: {}]
  %s5 = inlined_call_operand.vmem [shape: bf16[64,128], index: 5, kind: input, shape index: {}]
  %s6 = inlined_call_operand.vmem [shape: f32[4,512], index: 6, kind: input, shape index: {}]
  %s7 = inlined_call_operand.vmem [shape: f32[2,128], index: 7, kind: output, shape index: {}]
  %s8 = sld [smem:[#allocation0]]
  $region42: #{a3c_forward.1} parent=0
    _
  %s10 = ssub.s32 1, %s8
  %s11 = scalar_select 0, %s10, %s8
  $region1: #{a3c_forward.1} parent=0
    #allocation2 [shape = 'u8[1048576]{0}', space=vmem, size = 0x100000, scoped, tag = 'input window, operand 3, single buffered']
    #allocation3 [shape = 's32[1]{0}', space=sflag, size = 0x4, scoped, tag = 'scoped memory for a3c_forward.1']
    %12 = vsyncpa [#allocation3], 0
    // Predicated region
    $region2: #{a3c_forward.1} parent=1 // pred_check
      _
    $region3: #{a3c_forward.1} parent=1 // pred_check_branch
      %14 = sbr.rel (0) target = $region5
    $region4: #{a3c_forward.1} parent=1 // pred_region
      _
    $region5: #{a3c_forward.1} parent=1 // pred_fallthru
      _
    // Predicated region
    $region6: #{a3c_forward.1} parent=1 // pred_check
      _
    $region7: #{a3c_forward.1} parent=1 // pred_check_branch
      %16 = sbr.rel (0) target = $region9
    $region8: #{a3c_forward.1} parent=1 // pred_region
      _
    $region9: #{a3c_forward.1} parent=1 // pred_fallthru
      _
    // Predicated region
    $region10: #{a3c_forward.1} parent=1 // pred_check
      _
    $region11: #{a3c_forward.1} parent=1 // pred_check_branch
      %18 = sbr.rel (0) target = $region13
    $region12: #{a3c_forward.1} parent=1 // pred_region
      _
    $region13: #{a3c_forward.1} parent=1 // pred_fallthru
      _
    // Predicated region
    $region14: #{a3c_forward.1} parent=1 // pred_check
      _
    $region15: #{a3c_forward.1} parent=1 // pred_check_branch
      %20 = sbr.rel (0) target = $region17
    $region16: #{a3c_forward.1} parent=1 // pred_region
      %22 = vsyncadd [#allocation3], 0
      %s23 = sshll.u32 %s3, 4
      %s24 = int_to_ptr.hbm [resolvable:$true] %s23
      %s25 = sshll.u32 [#allocation2], 4
      %s26 = int_to_ptr.vmem [resolvable:$true] %s25
      %31 = dma.hbm_to_vmem [thread:$0]  %s24, 32768, %s26, [#allocation3], 256, 256, 16
    $region17: #{a3c_forward.1} parent=1 // pred_fallthru
      _
    // Predicated region
    $region18: #{a3c_forward.1} parent=1 // pred_check
      _
    $region19: #{a3c_forward.1} parent=1 // pred_check_branch
      %33 = sbr.rel (0) target = $region21
    $region20: #{a3c_forward.1} parent=1 // pred_region
      _
    $region21: #{a3c_forward.1} parent=1 // pred_fallthru
      _
    // Predicated region
    $region22: #{a3c_forward.1} parent=1 // pred_check
      _
    $region23: #{a3c_forward.1} parent=1 // pred_check_branch
      %35 = sbr.rel (0) target = $region25
    $region24: #{a3c_forward.1} parent=1 // pred_region
      _
    $region25: #{a3c_forward.1} parent=1 // pred_fallthru
      _
    // Predicated region
    $region26: #{a3c_forward.1} parent=1 // pred_check
      _
    $region27: #{a3c_forward.1} parent=1 // pred_check_branch
      %37 = sbr.rel (0) target = $region29
    $region28: #{a3c_forward.1} parent=1 // pred_region
      _
    $region29: #{a3c_forward.1} parent=1 // pred_fallthru
      _
    // Predicated region
    $region30: #{a3c_forward.1} parent=1 // pred_check
      _
    $region31: #{a3c_forward.1} parent=1 // pred_check_branch
      %39 = sbr.rel (0) target = $region33
    $region32: #{a3c_forward.1} parent=1 // pred_region
      %41 = dma.done [#allocation3], 32768
    $region33: #{a3c_forward.1} parent=1 // pred_fallthru
      _
    %v43 = vld [vmem:[%s6] sm:$0xff]
    %v44 = vld [vmem:[%s6 + $0x8] sm:$0xff]
    %v45 = vld [vmem:[%s5] sm:$0xf]
    %v46 = vld [vmem:[%s5 + $0x4] sm:$0xf]
    %v47 = vld [vmem:[%s5 + $0x8] sm:$0xf]
    %v48 = vld [vmem:[%s5 + $0xc] sm:$0xf]
    %v49 = vld [vmem:[%s5 + $0x10] sm:$0xf]
    %v50 = vld [vmem:[%s5 + $0x14] sm:$0xf]
    %v51 = vld [vmem:[%s5 + $0x18] sm:$0xf]
    %v52 = vld [vmem:[%s5 + $0x1c] sm:$0xf]
    %v53 = vld [vmem:[%s1] sm:$0x3]
    %v54 = vld [vmem:[%s0] sm:$0xff]
    %v55 = vld [vmem:[%s0 + $0x8] sm:$0xff]
    %v56 = vld [vmem:[%s2] sm:$0xf]
    %v57 = vld [vmem:[%s2 + $0x4] sm:$0xf]
    %v58 = vld [vmem:[%s2 + $0x8] sm:$0xf]
    %v59 = vld [vmem:[%s2 + $0xc] sm:$0xf]
    %v60 = vld [vmem:[%s2 + $0x10] sm:$0xf]
    %v61 = vld [vmem:[%s2 + $0x14] sm:$0xf]
    %v62 = vld [vmem:[%s2 + $0x18] sm:$0xf]
    %v63 = vld [vmem:[%s2 + $0x1c] sm:$0xf]
    %v64 = vld [vmem:[%s2 + $0x20] sm:$0xf]
    %v65 = vld [vmem:[%s2 + $0x24] sm:$0xf]
    %v66 = vld [vmem:[%s2 + $0x28] sm:$0xf]
    %v67 = vld [vmem:[%s2 + $0x2c] sm:$0xf]
    %v68 = vld [vmem:[%s2 + $0x30] sm:$0xf]
    %v69 = vld [vmem:[%s2 + $0x34] sm:$0xf]
    %v70 = vld [vmem:[%s2 + $0x38] sm:$0xf]
    %v71 = vld [vmem:[%s2 + $0x3c] sm:$0xf]
    %v72 = vld [vmem:[%s2 + $0x40] sm:$0xf]
    %v73 = vld [vmem:[%s2 + $0x44] sm:$0xf]
    %v74 = vld [vmem:[%s2 + $0x48] sm:$0xf]
    %v75 = vld [vmem:[%s2 + $0x4c] sm:$0xf]
    %v76 = vld [vmem:[%s2 + $0x50] sm:$0xf]
    %v77 = vld [vmem:[%s2 + $0x54] sm:$0xf]
    %v78 = vld [vmem:[%s2 + $0x58] sm:$0xf]
    %v79 = vld [vmem:[%s2 + $0x5c] sm:$0xf]
    %v80 = vld [vmem:[%s2 + $0x60] sm:$0xf]
    %v81 = vld [vmem:[%s2 + $0x64] sm:$0xf]
    %v82 = vld [vmem:[%s2 + $0x68] sm:$0xf]
    %v83 = vld [vmem:[%s2 + $0x6c] sm:$0xf]
    %v84 = vld [vmem:[%s2 + $0x70] sm:$0xf]
    %v85 = vld [vmem:[%s2 + $0x74] sm:$0xf]
    %v86 = vld [vmem:[%s2 + $0x78] sm:$0xf]
    %v87 = vld [vmem:[%s2 + $0x7c] sm:$0xf]
    %v88 = vperm.slane %v43, 0
    %v91 = vunpack.c.l.b16 %v54
    %v92 = vunpack.c.h.b16 %v54
    %v93 = vunpack.c.l.b16 %v55
    %v94 = vunpack.c.h.b16 %v55
    %v95 = vpack.c.b16 %v93, %v91
    %v96 = vpack.c.b16 %v94, %v92
    %v131 = vunpack.c.l.b16 %v56
    %v132 = vunpack.c.l.b16 %v57
    %v133 = vunpack.c.l.b16 %v58
    %v134 = vunpack.c.l.b16 %v59
    %v135 = vunpack.c.l.b16 %v60
    %v136 = vunpack.c.l.b16 %v61
    %v137 = vunpack.c.l.b16 %v62
    %v138 = vunpack.c.l.b16 %v63
    %v139 = vunpack.c.l.b16 %v64
    %v140 = vunpack.c.l.b16 %v65
    %v141 = vunpack.c.l.b16 %v66
    %v142 = vunpack.c.l.b16 %v67
    %v143 = vunpack.c.l.b16 %v68
    %v144 = vunpack.c.l.b16 %v69
    %v145 = vunpack.c.l.b16 %v70
    %v146 = vunpack.c.l.b16 %v71
    %v147 = vunpack.c.l.b16 %v72
    %v148 = vunpack.c.l.b16 %v73
    %v149 = vunpack.c.l.b16 %v74
    %v150 = vunpack.c.l.b16 %v75
    %v151 = vunpack.c.l.b16 %v76
    %v152 = vunpack.c.l.b16 %v77
    %v153 = vunpack.c.l.b16 %v78
    %v154 = vunpack.c.l.b16 %v79
    %v155 = vunpack.c.l.b16 %v80
    %v156 = vunpack.c.l.b16 %v81
    %v157 = vunpack.c.l.b16 %v82
    %v158 = vunpack.c.l.b16 %v83
    %v159 = vunpack.c.l.b16 %v84
    %v160 = vunpack.c.l.b16 %v85
    %v161 = vunpack.c.l.b16 %v86
    %v162 = vunpack.c.l.b16 %v87
    %v163 = vpack.c.b16 %v132, %v131
    %v164 = vpack.c.b16 %v134, %v133
    %v165 = vpack.c.b16 %v136, %v135
    %v166 = vpack.c.b16 %v138, %v137
    %v167 = vpack.c.b16 %v140, %v139
    %v168 = vpack.c.b16 %v142, %v141
    %v169 = vpack.c.b16 %v144, %v143
    %v170 = vpack.c.b16 %v146, %v145
    %v171 = vpack.c.b16 %v148, %v147
    %v172 = vpack.c.b16 %v150, %v149
    %v173 = vpack.c.b16 %v152, %v151
    %v174 = vpack.c.b16 %v154, %v153
    %v175 = vpack.c.b16 %v156, %v155
    %v176 = vpack.c.b16 %v158, %v157
    %v177 = vpack.c.b16 %v160, %v159
    %v178 = vpack.c.b16 %v162, %v161
    %195 = vmatpush.bf16.msra.mxu0 %v170
    %196 = vmatpush.bf16.msra.mxu0 %v169
    %197 = vmatpush.bf16.msra.mxu0 %v168
    %198 = vmatpush.bf16.msra.mxu0 %v167
    %199 = vmatpush.bf16.msra.mxu0 %v166
    %200 = vmatpush.bf16.msra.mxu0 %v165
    %201 = vmatpush.bf16.msra.mxu0 %v164
    %202 = vmatpush.bf16.msra.mxu0 %v163
    %203 = vmatmul.bf16.gmra.mxu0 %v95
    %v204 = vpop.f32.mrf.mxu0
    %v205 = vadd.f32 %v88, %v204
    %v206 = vpop.f32.mrf.mxu0
    %v207 = vadd.f32 %v88, %v206
    %208 = vdwg.mxu0
    %209 = vmatpush.bf16.msra.mxu0 %v178
    %210 = vmatpush.bf16.msra.mxu0 %v177
    %211 = vmatpush.bf16.msra.mxu0 %v176
    %212 = vmatpush.bf16.msra.mxu0 %v175
    %213 = vmatpush.bf16.msra.mxu0 %v174
    %214 = vmatpush.bf16.msra.mxu0 %v173
    %215 = vmatpush.bf16.msra.mxu0 %v172
    %216 = vmatpush.bf16.msra.mxu0 %v171
    %217 = vmatmul.bf16.gmra.mxu0 %v96
    %v218 = vpop.f32.mrf.mxu0
    %v219 = vadd.f32 %v205, %v218
    %v220 = vpop.f32.mrf.mxu0
    %v221 = vadd.f32 %v207, %v220
    %222 = vdwg.mxu0
    %v223 = vmax.f32 %v219, 0.0
    %v224 = vmax.f32 %v221, 0.0
    %v226 = vrot.slane %v223, 2
    %v228 = vrot.slane %v223, 4
    %v230 = vrot.slane %v223, 6
    %v233 = vrot.slane %v224, 2
    %v235 = vrot.slane %v224, 4
    %v237 = vrot.slane %v224, 6
    %v239 = vpack.c.bf16 %v223, %v223
    %v240 = vpack.c.bf16 %v226, %v226
    %v241 = vpack.c.bf16 %v228, %v228
    %v242 = vpack.c.bf16 %v230, %v230
    %v243 = vpack.c.bf16 %v224, %v224
    %v244 = vpack.c.bf16 %v233, %v233
    %v245 = vpack.c.bf16 %v235, %v235
    %v246 = vpack.c.bf16 %v237, %v237
    %v247 = vld [vmem:[#allocation2] sm:$0xff]
    %v248 = vld [vmem:[#allocation2 + $0x8] sm:$0xff]
    %v249 = vld [vmem:[#allocation2 + $0x10] sm:$0xff]
    %v250 = vld [vmem:[#allocation2 + $0x18] sm:$0xff]
    %v251 = vld [vmem:[#allocation2 + $0x20] sm:$0xff]
    %v252 = vld [vmem:[#allocation2 + $0x28] sm:$0xff]
    %v253 = vld [vmem:[#allocation2 + $0x30] sm:$0xff]
    %v254 = vld [vmem:[#allocation2 + $0x38] sm:$0xff]
    %v255 = vld [vmem:[#allocation2 + $0x40] sm:$0xff]
    %v256 = vld [vmem:[#allocation2 + $0x48] sm:$0xff]
    %v257 = vld [vmem:[#allocation2 + $0x50] sm:$0xff]
    %v258 = vld [vmem:[#allocation2 + $0x58] sm:$0xff]
    %v259 = vld [vmem:[#allocation2 + $0x60] sm:$0xff]
    %v260 = vld [vmem:[#allocation2 + $0x68] sm:$0xff]
    %v261 = vld [vmem:[#allocation2 + $0x70] sm:$0xff]
    %v262 = vld [vmem:[#allocation2 + $0x78] sm:$0xff]
    %v263 = vld [vmem:[#allocation2 + $0x80] sm:$0xff]
    %v264 = vld [vmem:[#allocation2 + $0x88] sm:$0xff]
    %v265 = vld [vmem:[#allocation2 + $0x90] sm:$0xff]
    %v266 = vld [vmem:[#allocation2 + $0x98] sm:$0xff]
    %v267 = vld [vmem:[#allocation2 + $0xa0] sm:$0xff]
    %v268 = vld [vmem:[#allocation2 + $0xa8] sm:$0xff]
    %v269 = vld [vmem:[#allocation2 + $0xb0] sm:$0xff]
    %v270 = vld [vmem:[#allocation2 + $0xb8] sm:$0xff]
    %v271 = vld [vmem:[#allocation2 + $0xc0] sm:$0xff]
    %v272 = vld [vmem:[#allocation2 + $0xc8] sm:$0xff]
    %v273 = vld [vmem:[#allocation2 + $0xd0] sm:$0xff]
    %v274 = vld [vmem:[#allocation2 + $0xd8] sm:$0xff]
    %v275 = vld [vmem:[#allocation2 + $0xe0] sm:$0xff]
    %v276 = vld [vmem:[#allocation2 + $0xe8] sm:$0xff]
    %v277 = vld [vmem:[#allocation2 + $0xf0] sm:$0xff]
    %v278 = vld [vmem:[#allocation2 + $0xf8] sm:$0xff]
    %v279 = vld [vmem:[#allocation2 + $0x100] sm:$0xff]
    %v280 = vld [vmem:[#allocation2 + $0x108] sm:$0xff]
    %v281 = vld [vmem:[#allocation2 + $0x110] sm:$0xff]
    %v282 = vld [vmem:[#allocation2 + $0x118] sm:$0xff]
    %v283 = vld [vmem:[#allocation2 + $0x120] sm:$0xff]
    %v284 = vld [vmem:[#allocation2 + $0x128] sm:$0xff]
    %v285 = vld [vmem:[#allocation2 + $0x130] sm:$0xff]
    %v286 = vld [vmem:[#allocation2 + $0x138] sm:$0xff]
    %v287 = vld [vmem:[#allocation2 + $0x140] sm:$0xff]
    %v288 = vld [vmem:[#allocation2 + $0x148] sm:$0xff]
    %v289 = vld [vmem:[#allocation2 + $0x150] sm:$0xff]
    %v290 = vld [vmem:[#allocation2 + $0x158] sm:$0xff]
    %v291 = vld [vmem:[#allocation2 + $0x160] sm:$0xff]
    %v292 = vld [vmem:[#allocation2 + $0x168] sm:$0xff]
    %v293 = vld [vmem:[#allocation2 + $0x170] sm:$0xff]
    %v294 = vld [vmem:[#allocation2 + $0x178] sm:$0xff]
    %v295 = vld [vmem:[#allocation2 + $0x180] sm:$0xff]
    %v296 = vld [vmem:[#allocation2 + $0x188] sm:$0xff]
    %v297 = vld [vmem:[#allocation2 + $0x190] sm:$0xff]
    %v298 = vld [vmem:[#allocation2 + $0x198] sm:$0xff]
    %v299 = vld [vmem:[#allocation2 + $0x1a0] sm:$0xff]
    %v300 = vld [vmem:[#allocation2 + $0x1a8] sm:$0xff]
    %v301 = vld [vmem:[#allocation2 + $0x1b0] sm:$0xff]
    %v302 = vld [vmem:[#allocation2 + $0x1b8] sm:$0xff]
    %v303 = vld [vmem:[#allocation2 + $0x1c0] sm:$0xff]
    %v304 = vld [vmem:[#allocation2 + $0x1c8] sm:$0xff]
    %v305 = vld [vmem:[#allocation2 + $0x1d0] sm:$0xff]
    %v306 = vld [vmem:[#allocation2 + $0x1d8] sm:$0xff]
    %v307 = vld [vmem:[#allocation2 + $0x1e0] sm:$0xff]
    %v308 = vld [vmem:[#allocation2 + $0x1e8] sm:$0xff]
    %v309 = vld [vmem:[#allocation2 + $0x1f0] sm:$0xff]
    %v310 = vld [vmem:[#allocation2 + $0x1f8] sm:$0xff]
    %v311 = vld [vmem:[#allocation2 + $0x200] sm:$0xff]
    %v312 = vld [vmem:[#allocation2 + $0x208] sm:$0xff]
    %v313 = vld [vmem:[#allocation2 + $0x210] sm:$0xff]
    %v314 = vld [vmem:[#allocation2 + $0x218] sm:$0xff]
    %v315 = vld [vmem:[#allocation2 + $0x220] sm:$0xff]
    %v316 = vld [vmem:[#allocation2 + $0x228] sm:$0xff]
    %v317 = vld [vmem:[#allocation2 + $0x230] sm:$0xff]
    %v318 = vld [vmem:[#allocation2 + $0x238] sm:$0xff]
    %v319 = vld [vmem:[#allocation2 + $0x240] sm:$0xff]
    %v320 = vld [vmem:[#allocation2 + $0x248] sm:$0xff]
    %v321 = vld [vmem:[#allocation2 + $0x250] sm:$0xff]
    %v322 = vld [vmem:[#allocation2 + $0x258] sm:$0xff]
    %v323 = vld [vmem:[#allocation2 + $0x260] sm:$0xff]
    %v324 = vld [vmem:[#allocation2 + $0x268] sm:$0xff]
    %v325 = vld [vmem:[#allocation2 + $0x270] sm:$0xff]
    %v326 = vld [vmem:[#allocation2 + $0x278] sm:$0xff]
    %v327 = vld [vmem:[#allocation2 + $0x280] sm:$0xff]
    %v328 = vld [vmem:[#allocation2 + $0x288] sm:$0xff]
    %v329 = vld [vmem:[#allocation2 + $0x290] sm:$0xff]
    %v330 = vld [vmem:[#allocation2 + $0x298] sm:$0xff]
    %v331 = vld [vmem:[#allocation2 + $0x2a0] sm:$0xff]
    %v332 = vld [vmem:[#allocation2 + $0x2a8] sm:$0xff]
    %v333 = vld [vmem:[#allocation2 + $0x2b0] sm:$0xff]
    %v334 = vld [vmem:[#allocation2 + $0x2b8] sm:$0xff]
    %v335 = vld [vmem:[#allocation2 + $0x2c0] sm:$0xff]
    %v336 = vld [vmem:[#allocation2 + $0x2c8] sm:$0xff]
    %v337 = vld [vmem:[#allocation2 + $0x2d0] sm:$0xff]
    %v338 = vld [vmem:[#allocation2 + $0x2d8] sm:$0xff]
    %v339 = vld [vmem:[#allocation2 + $0x2e0] sm:$0xff]
    %v340 = vld [vmem:[#allocation2 + $0x2e8] sm:$0xff]
    %v341 = vld [vmem:[#allocation2 + $0x2f0] sm:$0xff]
    %v342 = vld [vmem:[#allocation2 + $0x2f8] sm:$0xff]
    %v343 = vld [vmem:[#allocation2 + $0x300] sm:$0xff]
    %v344 = vld [vmem:[#allocation2 + $0x308] sm:$0xff]
    %v345 = vld [vmem:[#allocation2 + $0x310] sm:$0xff]
    %v346 = vld [vmem:[#allocation2 + $0x318] sm:$0xff]
    %v347 = vld [vmem:[#allocation2 + $0x320] sm:$0xff]
    %v348 = vld [vmem:[#allocation2 + $0x328] sm:$0xff]
    %v349 = vld [vmem:[#allocation2 + $0x330] sm:$0xff]
    %v350 = vld [vmem:[#allocation2 + $0x338] sm:$0xff]
    %v351 = vld [vmem:[#allocation2 + $0x340] sm:$0xff]
    %v352 = vld [vmem:[#allocation2 + $0x348] sm:$0xff]
    %v353 = vld [vmem:[#allocation2 + $0x350] sm:$0xff]
    %v354 = vld [vmem:[#allocation2 + $0x358] sm:$0xff]
    %v355 = vld [vmem:[#allocation2 + $0x360] sm:$0xff]
    %v356 = vld [vmem:[#allocation2 + $0x368] sm:$0xff]
    %v357 = vld [vmem:[#allocation2 + $0x370] sm:$0xff]
    %v358 = vld [vmem:[#allocation2 + $0x378] sm:$0xff]
    %v359 = vld [vmem:[#allocation2 + $0x380] sm:$0xff]
    %v360 = vld [vmem:[#allocation2 + $0x388] sm:$0xff]
    %v361 = vld [vmem:[#allocation2 + $0x390] sm:$0xff]
    %v362 = vld [vmem:[#allocation2 + $0x398] sm:$0xff]
    %v363 = vld [vmem:[#allocation2 + $0x3a0] sm:$0xff]
    %v364 = vld [vmem:[#allocation2 + $0x3a8] sm:$0xff]
    %v365 = vld [vmem:[#allocation2 + $0x3b0] sm:$0xff]
    %v366 = vld [vmem:[#allocation2 + $0x3b8] sm:$0xff]
    %v367 = vld [vmem:[#allocation2 + $0x3c0] sm:$0xff]
    %v368 = vld [vmem:[#allocation2 + $0x3c8] sm:$0xff]
    %v369 = vld [vmem:[#allocation2 + $0x3d0] sm:$0xff]
    %v370 = vld [vmem:[#allocation2 + $0x3d8] sm:$0xff]
    %v371 = vld [vmem:[#allocation2 + $0x3e0] sm:$0xff]
    %v372 = vld [vmem:[#allocation2 + $0x3e8] sm:$0xff]
    %v373 = vld [vmem:[#allocation2 + $0x3f0] sm:$0xff]
    %v374 = vld [vmem:[#allocation2 + $0x3f8] sm:$0xff]
    %v375 = vld [vmem:[#allocation2 + $0x400] sm:$0xff]
    %v376 = vld [vmem:[#allocation2 + $0x408] sm:$0xff]
    %v377 = vld [vmem:[#allocation2 + $0x410] sm:$0xff]
    %v378 = vld [vmem:[#allocation2 + $0x418] sm:$0xff]
    %v379 = vld [vmem:[#allocation2 + $0x420] sm:$0xff]
    %v380 = vld [vmem:[#allocation2 + $0x428] sm:$0xff]
    %v381 = vld [vmem:[#allocation2 + $0x430] sm:$0xff]
    %v382 = vld [vmem:[#allocation2 + $0x438] sm:$0xff]
    %v383 = vld [vmem:[#allocation2 + $0x440] sm:$0xff]
    %v384 = vld [vmem:[#allocation2 + $0x448] sm:$0xff]
    %v385 = vld [vmem:[#allocation2 + $0x450] sm:$0xff]
    %v386 = vld [vmem:[#allocation2 + $0x458] sm:$0xff]
    %v387 = vld [vmem:[#allocation2 + $0x460] sm:$0xff]
    %v388 = vld [vmem:[#allocation2 + $0x468] sm:$0xff]
    %v389 = vld [vmem:[#allocation2 + $0x470] sm:$0xff]
    %v390 = vld [vmem:[#allocation2 + $0x478] sm:$0xff]
    %v391 = vld [vmem:[#allocation2 + $0x480] sm:$0xff]
    %v392 = vld [vmem:[#allocation2 + $0x488] sm:$0xff]
    %v393 = vld [vmem:[#allocation2 + $0x490] sm:$0xff]
    %v394 = vld [vmem:[#allocation2 + $0x498] sm:$0xff]
    %v395 = vld [vmem:[#allocation2 + $0x4a0] sm:$0xff]
    %v396 = vld [vmem:[#allocation2 + $0x4a8] sm:$0xff]
    %v397 = vld [vmem:[#allocation2 + $0x4b0] sm:$0xff]
    %v398 = vld [vmem:[#allocation2 + $0x4b8] sm:$0xff]
    %v399 = vld [vmem:[#allocation2 + $0x4c0] sm:$0xff]
    %v400 = vld [vmem:[#allocation2 + $0x4c8] sm:$0xff]
    %v401 = vld [vmem:[#allocation2 + $0x4d0] sm:$0xff]
    %v402 = vld [vmem:[#allocation2 + $0x4d8] sm:$0xff]
    %v403 = vld [vmem:[#allocation2 + $0x4e0] sm:$0xff]
    %v404 = vld [vmem:[#allocation2 + $0x4e8] sm:$0xff]
    %v405 = vld [vmem:[#allocation2 + $0x4f0] sm:$0xff]
    %v406 = vld [vmem:[#allocation2 + $0x4f8] sm:$0xff]
    %v407 = vld [vmem:[#allocation2 + $0x500] sm:$0xff]
    %v408 = vld [vmem:[#allocation2 + $0x508] sm:$0xff]
    %v409 = vld [vmem:[#allocation2 + $0x510] sm:$0xff]
    %v410 = vld [vmem:[#allocation2 + $0x518] sm:$0xff]
    %v411 = vld [vmem:[#allocation2 + $0x520] sm:$0xff]
    %v412 = vld [vmem:[#allocation2 + $0x528] sm:$0xff]
    %v413 = vld [vmem:[#allocation2 + $0x530] sm:$0xff]
    %v414 = vld [vmem:[#allocation2 + $0x538] sm:$0xff]
    %v415 = vld [vmem:[#allocation2 + $0x540] sm:$0xff]
    %v416 = vld [vmem:[#allocation2 + $0x548] sm:$0xff]
    %v417 = vld [vmem:[#allocation2 + $0x550] sm:$0xff]
    %v418 = vld [vmem:[#allocation2 + $0x558] sm:$0xff]
    %v419 = vld [vmem:[#allocation2 + $0x560] sm:$0xff]
    %v420 = vld [vmem:[#allocation2 + $0x568] sm:$0xff]
    %v421 = vld [vmem:[#allocation2 + $0x570] sm:$0xff]
    %v422 = vld [vmem:[#allocation2 + $0x578] sm:$0xff]
    %v423 = vld [vmem:[#allocation2 + $0x580] sm:$0xff]
    %v424 = vld [vmem:[#allocation2 + $0x588] sm:$0xff]
    %v425 = vld [vmem:[#allocation2 + $0x590] sm:$0xff]
    %v426 = vld [vmem:[#allocation2 + $0x598] sm:$0xff]
    %v427 = vld [vmem:[#allocation2 + $0x5a0] sm:$0xff]
    %v428 = vld [vmem:[#allocation2 + $0x5a8] sm:$0xff]
    %v429 = vld [vmem:[#allocation2 + $0x5b0] sm:$0xff]
    %v430 = vld [vmem:[#allocation2 + $0x5b8] sm:$0xff]
    %v431 = vld [vmem:[#allocation2 + $0x5c0] sm:$0xff]
    %v432 = vld [vmem:[#allocation2 + $0x5c8] sm:$0xff]
    %v433 = vld [vmem:[#allocation2 + $0x5d0] sm:$0xff]
    %v434 = vld [vmem:[#allocation2 + $0x5d8] sm:$0xff]
    %v435 = vld [vmem:[#allocation2 + $0x5e0] sm:$0xff]
    %v436 = vld [vmem:[#allocation2 + $0x5e8] sm:$0xff]
    %v437 = vld [vmem:[#allocation2 + $0x5f0] sm:$0xff]
    %v438 = vld [vmem:[#allocation2 + $0x5f8] sm:$0xff]
    %v439 = vld [vmem:[#allocation2 + $0x600] sm:$0xff]
    %v440 = vld [vmem:[#allocation2 + $0x608] sm:$0xff]
    %v441 = vld [vmem:[#allocation2 + $0x610] sm:$0xff]
    %v442 = vld [vmem:[#allocation2 + $0x618] sm:$0xff]
    %v443 = vld [vmem:[#allocation2 + $0x620] sm:$0xff]
    %v444 = vld [vmem:[#allocation2 + $0x628] sm:$0xff]
    %v445 = vld [vmem:[#allocation2 + $0x630] sm:$0xff]
    %v446 = vld [vmem:[#allocation2 + $0x638] sm:$0xff]
    %v447 = vld [vmem:[#allocation2 + $0x640] sm:$0xff]
    %v448 = vld [vmem:[#allocation2 + $0x648] sm:$0xff]
    %v449 = vld [vmem:[#allocation2 + $0x650] sm:$0xff]
    %v450 = vld [vmem:[#allocation2 + $0x658] sm:$0xff]
    %v451 = vld [vmem:[#allocation2 + $0x660] sm:$0xff]
    %v452 = vld [vmem:[#allocation2 + $0x668] sm:$0xff]
    %v453 = vld [vmem:[#allocation2 + $0x670] sm:$0xff]
    %v454 = vld [vmem:[#allocation2 + $0x678] sm:$0xff]
    %v455 = vld [vmem:[#allocation2 + $0x680] sm:$0xff]
    %v456 = vld [vmem:[#allocation2 + $0x688] sm:$0xff]
    %v457 = vld [vmem:[#allocation2 + $0x690] sm:$0xff]
    %v458 = vld [vmem:[#allocation2 + $0x698] sm:$0xff]
    %v459 = vld [vmem:[#allocation2 + $0x6a0] sm:$0xff]
    %v460 = vld [vmem:[#allocation2 + $0x6a8] sm:$0xff]
    %v461 = vld [vmem:[#allocation2 + $0x6b0] sm:$0xff]
    %v462 = vld [vmem:[#allocation2 + $0x6b8] sm:$0xff]
    %v463 = vld [vmem:[#allocation2 + $0x6c0] sm:$0xff]
    %v464 = vld [vmem:[#allocation2 + $0x6c8] sm:$0xff]
    %v465 = vld [vmem:[#allocation2 + $0x6d0] sm:$0xff]
    %v466 = vld [vmem:[#allocation2 + $0x6d8] sm:$0xff]
    %v467 = vld [vmem:[#allocation2 + $0x6e0] sm:$0xff]
    %v468 = vld [vmem:[#allocation2 + $0x6e8] sm:$0xff]
    %v469 = vld [vmem:[#allocation2 + $0x6f0] sm:$0xff]
    %v470 = vld [vmem:[#allocation2 + $0x6f8] sm:$0xff]
    %v471 = vld [vmem:[#allocation2 + $0x700] sm:$0xff]
    %v472 = vld [vmem:[#allocation2 + $0x708] sm:$0xff]
    %v473 = vld [vmem:[#allocation2 + $0x710] sm:$0xff]
    %v474 = vld [vmem:[#allocation2 + $0x718] sm:$0xff]
    %v475 = vld [vmem:[#allocation2 + $0x720] sm:$0xff]
    %v476 = vld [vmem:[#allocation2 + $0x728] sm:$0xff]
    %v477 = vld [vmem:[#allocation2 + $0x730] sm:$0xff]
    %v478 = vld [vmem:[#allocation2 + $0x738] sm:$0xff]
    %v479 = vld [vmem:[#allocation2 + $0x740] sm:$0xff]
    %v480 = vld [vmem:[#allocation2 + $0x748] sm:$0xff]
    %v481 = vld [vmem:[#allocation2 + $0x750] sm:$0xff]
    %v482 = vld [vmem:[#allocation2 + $0x758] sm:$0xff]
    %v483 = vld [vmem:[#allocation2 + $0x760] sm:$0xff]
    %v484 = vld [vmem:[#allocation2 + $0x768] sm:$0xff]
    %v485 = vld [vmem:[#allocation2 + $0x770] sm:$0xff]
    %v486 = vld [vmem:[#allocation2 + $0x778] sm:$0xff]
    %v487 = vld [vmem:[#allocation2 + $0x780] sm:$0xff]
    %v488 = vld [vmem:[#allocation2 + $0x788] sm:$0xff]
    %v489 = vld [vmem:[#allocation2 + $0x790] sm:$0xff]
    %v490 = vld [vmem:[#allocation2 + $0x798] sm:$0xff]
    %v491 = vld [vmem:[#allocation2 + $0x7a0] sm:$0xff]
    %v492 = vld [vmem:[#allocation2 + $0x7a8] sm:$0xff]
    %v493 = vld [vmem:[#allocation2 + $0x7b0] sm:$0xff]
    %v494 = vld [vmem:[#allocation2 + $0x7b8] sm:$0xff]
    %v495 = vld [vmem:[#allocation2 + $0x7c0] sm:$0xff]
    %v496 = vld [vmem:[#allocation2 + $0x7c8] sm:$0xff]
    %v497 = vld [vmem:[#allocation2 + $0x7d0] sm:$0xff]
    %v498 = vld [vmem:[#allocation2 + $0x7d8] sm:$0xff]
    %v499 = vld [vmem:[#allocation2 + $0x7e0] sm:$0xff]
    %v500 = vld [vmem:[#allocation2 + $0x7e8] sm:$0xff]
    %v501 = vld [vmem:[#allocation2 + $0x7f0] sm:$0xff]
    %v502 = vld [vmem:[#allocation2 + $0x7f8] sm:$0xff]
    %v505 = vperm.slane %v43, 1
    %v506 = vperm.slane %v43, 5
    %v507 = vperm.slane %v44, 1
    %v508 = vperm.slane %v44, 5
    %v513 = vperm.slane %v505, 1
    %v514 = vperm.slane %v506, 1
    %v515 = vperm.slane %v507, 1
    %v516 = vperm.slane %v508, 1
    %v773 = vunpack.c.l.b16 %v247
    %v774 = vunpack.c.h.b16 %v247
    %v775 = vunpack.c.l.b16 %v248
    %v776 = vunpack.c.h.b16 %v248
    %v777 = vunpack.c.l.b16 %v249
    %v778 = vunpack.c.h.b16 %v249
    %v779 = vunpack.c.l.b16 %v250
    %v780 = vunpack.c.h.b16 %v250
    %v781 = vunpack.c.l.b16 %v251
    %v782 = vunpack.c.h.b16 %v251
    %v783 = vunpack.c.l.b16 %v252
    %v784 = vunpack.c.h.b16 %v252
    %v785 = vunpack.c.l.b16 %v253
    %v786 = vunpack.c.h.b16 %v253
    %v787 = vunpack.c.l.b16 %v254
    %v788 = vunpack.c.h.b16 %v254
    %v789 = vunpack.c.l.b16 %v255
    %v790 = vunpack.c.h.b16 %v255
    %v791 = vunpack.c.l.b16 %v256
    %v792 = vunpack.c.h.b16 %v256
    %v793 = vunpack.c.l.b16 %v257
    %v794 = vunpack.c.h.b16 %v257
    %v795 = vunpack.c.l.b16 %v258
    %v796 = vunpack.c.h.b16 %v258
    %v797 = vunpack.c.l.b16 %v259
    %v798 = vunpack.c.h.b16 %v259
    %v799 = vunpack.c.l.b16 %v260
    %v800 = vunpack.c.h.b16 %v260
    %v801 = vunpack.c.l.b16 %v261
    %v802 = vunpack.c.h.b16 %v261
    %v803 = vunpack.c.l.b16 %v262
    %v804 = vunpack.c.h.b16 %v262
    %v805 = vunpack.c.l.b16 %v263
    %v806 = vunpack.c.h.b16 %v263
    %v807 = vunpack.c.l.b16 %v264
    %v808 = vunpack.c.h.b16 %v264
    %v809 = vunpack.c.l.b16 %v265
    %v810 = vunpack.c.h.b16 %v265
    %v811 = vunpack.c.l.b16 %v266
    %v812 = vunpack.c.h.b16 %v266
    %v813 = vunpack.c.l.b16 %v267
    %v814 = vunpack.c.h.b16 %v267
    %v815 = vunpack.c.l.b16 %v268
    %v816 = vunpack.c.h.b16 %v268
    %v817 = vunpack.c.l.b16 %v269
    %v818 = vunpack.c.h.b16 %v269
    %v819 = vunpack.c.l.b16 %v270
    %v820 = vunpack.c.h.b16 %v270
    %v821 = vunpack.c.l.b16 %v271
    %v822 = vunpack.c.h.b16 %v271
    %v823 = vunpack.c.l.b16 %v272
    %v824 = vunpack.c.h.b16 %v272
    %v825 = vunpack.c.l.b16 %v273
    %v826 = vunpack.c.h.b16 %v273
    %v827 = vunpack.c.l.b16 %v274
    %v828 = vunpack.c.h.b16 %v274
    %v829 = vunpack.c.l.b16 %v275
    %v830 = vunpack.c.h.b16 %v275
    %v831 = vunpack.c.l.b16 %v276
    %v832 = vunpack.c.h.b16 %v276
    %v833 = vunpack.c.l.b16 %v277
    %v834 = vunpack.c.h.b16 %v277
    %v835 = vunpack.c.l.b16 %v278
    %v836 = vunpack.c.h.b16 %v278
    %v837 = vunpack.c.l.b16 %v279
    %v838 = vunpack.c.h.b16 %v279
    %v839 = vunpack.c.l.b16 %v280
    %v840 = vunpack.c.h.b16 %v280
    %v841 = vunpack.c.l.b16 %v281
    %v842 = vunpack.c.h.b16 %v281
    %v843 = vunpack.c.l.b16 %v282
    %v844 = vunpack.c.h.b16 %v282
    %v845 = vunpack.c.l.b16 %v283
    %v846 = vunpack.c.h.b16 %v283
    %v847 = vunpack.c.l.b16 %v284
    %v848 = vunpack.c.h.b16 %v284
    %v849 = vunpack.c.l.b16 %v285
    %v850 = vunpack.c.h.b16 %v285
    %v851 = vunpack.c.l.b16 %v286
    %v852 = vunpack.c.h.b16 %v286
    %v853 = vunpack.c.l.b16 %v287
    %v854 = vunpack.c.h.b16 %v287
    %v855 = vunpack.c.l.b16 %v288
    %v856 = vunpack.c.h.b16 %v288
    %v857 = vunpack.c.l.b16 %v289
    %v858 = vunpack.c.h.b16 %v289
    %v859 = vunpack.c.l.b16 %v290
    %v860 = vunpack.c.h.b16 %v290
    %v861 = vunpack.c.l.b16 %v291
    %v862 = vunpack.c.h.b16 %v291
    %v863 = vunpack.c.l.b16 %v292
    %v864 = vunpack.c.h.b16 %v292
    %v865 = vunpack.c.l.b16 %v293
    %v866 = vunpack.c.h.b16 %v293
    %v867 = vunpack.c.l.b16 %v294
    %v868 = vunpack.c.h.b16 %v294
    %v869 = vunpack.c.l.b16 %v295
    %v870 = vunpack.c.h.b16 %v295
    %v871 = vunpack.c.l.b16 %v296
    %v872 = vunpack.c.h.b16 %v296
    %v873 = vunpack.c.l.b16 %v297
    %v874 = vunpack.c.h.b16 %v297
    %v875 = vunpack.c.l.b16 %v298
    %v876 = vunpack.c.h.b16 %v298
    %v877 = vunpack.c.l.b16 %v299
    %v878 = vunpack.c.h.b16 %v299
    %v879 = vunpack.c.l.b16 %v300
    %v880 = vunpack.c.h.b16 %v300
    %v881 = vunpack.c.l.b16 %v301
    %v882 = vunpack.c.h.b16 %v301
    %v883 = vunpack.c.l.b16 %v302
    %v884 = vunpack.c.h.b16 %v302
    %v885 = vunpack.c.l.b16 %v303
    %v886 = vunpack.c.h.b16 %v303
    %v887 = vunpack.c.l.b16 %v304
    %v888 = vunpack.c.h.b16 %v304
    %v889 = vunpack.c.l.b16 %v305
    %v890 = vunpack.c.h.b16 %v305
    %v891 = vunpack.c.l.b16 %v306
    %v892 = vunpack.c.h.b16 %v306
    %v893 = vunpack.c.l.b16 %v307
    %v894 = vunpack.c.h.b16 %v307
    %v895 = vunpack.c.l.b16 %v308
    %v896 = vunpack.c.h.b16 %v308
    %v897 = vunpack.c.l.b16 %v309
    %v898 = vunpack.c.h.b16 %v309
    %v899 = vunpack.c.l.b16 %v310
    %v900 = vunpack.c.h.b16 %v310
    %v901 = vunpack.c.l.b16 %v311
    %v902 = vunpack.c.h.b16 %v311
    %v903 = vunpack.c.l.b16 %v312
    %v904 = vunpack.c.h.b16 %v312
    %v905 = vunpack.c.l.b16 %v313
    %v906 = vunpack.c.h.b16 %v313
    %v907 = vunpack.c.l.b16 %v314
    %v908 = vunpack.c.h.b16 %v314
    %v909 = vunpack.c.l.b16 %v315
    %v910 = vunpack.c.h.b16 %v315
    %v911 = vunpack.c.l.b16 %v316
    %v912 = vunpack.c.h.b16 %v316
    %v913 = vunpack.c.l.b16 %v317
    %v914 = vunpack.c.h.b16 %v317
    %v915 = vunpack.c.l.b16 %v318
    %v916 = vunpack.c.h.b16 %v318
    %v917 = vunpack.c.l.b16 %v319
    %v918 = vunpack.c.h.b16 %v319
    %v919 = vunpack.c.l.b16 %v320
    %v920 = vunpack.c.h.b16 %v320
    %v921 = vunpack.c.l.b16 %v321
    %v922 = vunpack.c.h.b16 %v321
    %v923 = vunpack.c.l.b16 %v322
    %v924 = vunpack.c.h.b16 %v322
    %v925 = vunpack.c.l.b16 %v323
    %v926 = vunpack.c.h.b16 %v323
    %v927 = vunpack.c.l.b16 %v324
    %v928 = vunpack.c.h.b16 %v324
    %v929 = vunpack.c.l.b16 %v325
    %v930 = vunpack.c.h.b16 %v325
    %v931 = vunpack.c.l.b16 %v326
    %v932 = vunpack.c.h.b16 %v326
    %v933 = vunpack.c.l.b16 %v327
    %v934 = vunpack.c.h.b16 %v327
    %v935 = vunpack.c.l.b16 %v328
    %v936 = vunpack.c.h.b16 %v328
    %v937 = vunpack.c.l.b16 %v329
    %v938 = vunpack.c.h.b16 %v329
    %v939 = vunpack.c.l.b16 %v330
    %v940 = vunpack.c.h.b16 %v330
    %v941 = vunpack.c.l.b16 %v331
    %v942 = vunpack.c.h.b16 %v331
    %v943 = vunpack.c.l.b16 %v332
    %v944 = vunpack.c.h.b16 %v332
    %v945 = vunpack.c.l.b16 %v333
    %v946 = vunpack.c.h.b16 %v333
    %v947 = vunpack.c.l.b16 %v334
    %v948 = vunpack.c.h.b16 %v334
    %v949 = vunpack.c.l.b16 %v335
    %v950 = vunpack.c.h.b16 %v335
    %v951 = vunpack.c.l.b16 %v336
    %v952 = vunpack.c.h.b16 %v336
    %v953 = vunpack.c.l.b16 %v337
    %v954 = vunpack.c.h.b16 %v337
    %v955 = vunpack.c.l.b16 %v338
    %v956 = vunpack.c.h.b16 %v338
    %v957 = vunpack.c.l.b16 %v339
    %v958 = vunpack.c.h.b16 %v339
    %v959 = vunpack.c.l.b16 %v340
    %v960 = vunpack.c.h.b16 %v340
    %v961 = vunpack.c.l.b16 %v341
    %v962 = vunpack.c.h.b16 %v341
    %v963 = vunpack.c.l.b16 %v342
    %v964 = vunpack.c.h.b16 %v342
    %v965 = vunpack.c.l.b16 %v343
    %v966 = vunpack.c.h.b16 %v343
    %v967 = vunpack.c.l.b16 %v344
    %v968 = vunpack.c.h.b16 %v344
    %v969 = vunpack.c.l.b16 %v345
    %v970 = vunpack.c.h.b16 %v345
    %v971 = vunpack.c.l.b16 %v346
    %v972 = vunpack.c.h.b16 %v346
    %v973 = vunpack.c.l.b16 %v347
    %v974 = vunpack.c.h.b16 %v347
    %v975 = vunpack.c.l.b16 %v348
    %v976 = vunpack.c.h.b16 %v348
    %v977 = vunpack.c.l.b16 %v349
    %v978 = vunpack.c.h.b16 %v349
    %v979 = vunpack.c.l.b16 %v350
    %v980 = vunpack.c.h.b16 %v350
    %v981 = vunpack.c.l.b16 %v351
    %v982 = vunpack.c.h.b16 %v351
    %v983 = vunpack.c.l.b16 %v352
    %v984 = vunpack.c.h.b16 %v352
    %v985 = vunpack.c.l.b16 %v353
    %v986 = vunpack.c.h.b16 %v353
    %v987 = vunpack.c.l.b16 %v354
    %v988 = vunpack.c.h.b16 %v354
    %v989 = vunpack.c.l.b16 %v355
    %v990 = vunpack.c.h.b16 %v355
    %v991 = vunpack.c.l.b16 %v356
    %v992 = vunpack.c.h.b16 %v356
    %v993 = vunpack.c.l.b16 %v357
    %v994 = vunpack.c.h.b16 %v357
    %v995 = vunpack.c.l.b16 %v358
    %v996 = vunpack.c.h.b16 %v358
    %v997 = vunpack.c.l.b16 %v359
    %v998 = vunpack.c.h.b16 %v359
    %v999 = vunpack.c.l.b16 %v360
    %v1000 = vunpack.c.h.b16 %v360
    %v1001 = vunpack.c.l.b16 %v361
    %v1002 = vunpack.c.h.b16 %v361
    %v1003 = vunpack.c.l.b16 %v362
    %v1004 = vunpack.c.h.b16 %v362
    %v1005 = vunpack.c.l.b16 %v363
    %v1006 = vunpack.c.h.b16 %v363
    %v1007 = vunpack.c.l.b16 %v364
    %v1008 = vunpack.c.h.b16 %v364
    %v1009 = vunpack.c.l.b16 %v365
    %v1010 = vunpack.c.h.b16 %v365
    %v1011 = vunpack.c.l.b16 %v366
    %v1012 = vunpack.c.h.b16 %v366
    %v1013 = vunpack.c.l.b16 %v367
    %v1014 = vunpack.c.h.b16 %v367
    %v1015 = vunpack.c.l.b16 %v368
    %v1016 = vunpack.c.h.b16 %v368
    %v1017 = vunpack.c.l.b16 %v369
    %v1018 = vunpack.c.h.b16 %v369
    %v1019 = vunpack.c.l.b16 %v370
    %v1020 = vunpack.c.h.b16 %v370
    %v1021 = vunpack.c.l.b16 %v371
    %v1022 = vunpack.c.h.b16 %v371
    %v1023 = vunpack.c.l.b16 %v372
    %v1024 = vunpack.c.h.b16 %v372
    %v1025 = vunpack.c.l.b16 %v373
    %v1026 = vunpack.c.h.b16 %v373
    %v1027 = vunpack.c.l.b16 %v374
    %v1028 = vunpack.c.h.b16 %v374
    %v1029 = vunpack.c.l.b16 %v375
    %v1030 = vunpack.c.h.b16 %v375
    %v1031 = vunpack.c.l.b16 %v376
    %v1032 = vunpack.c.h.b16 %v376
    %v1033 = vunpack.c.l.b16 %v377
    %v1034 = vunpack.c.h.b16 %v377
    %v1035 = vunpack.c.l.b16 %v378
    %v1036 = vunpack.c.h.b16 %v378
    %v1037 = vunpack.c.l.b16 %v379
    %v1038 = vunpack.c.h.b16 %v379
    %v1039 = vunpack.c.l.b16 %v380
    %v1040 = vunpack.c.h.b16 %v380
    %v1041 = vunpack.c.l.b16 %v381
    %v1042 = vunpack.c.h.b16 %v381
    %v1043 = vunpack.c.l.b16 %v382
    %v1044 = vunpack.c.h.b16 %v382
    %v1045 = vunpack.c.l.b16 %v383
    %v1046 = vunpack.c.h.b16 %v383
    %v1047 = vunpack.c.l.b16 %v384
    %v1048 = vunpack.c.h.b16 %v384
    %v1049 = vunpack.c.l.b16 %v385
    %v1050 = vunpack.c.h.b16 %v385
    %v1051 = vunpack.c.l.b16 %v386
    %v1052 = vunpack.c.h.b16 %v386
    %v1053 = vunpack.c.l.b16 %v387
    %v1054 = vunpack.c.h.b16 %v387
    %v1055 = vunpack.c.l.b16 %v388
    %v1056 = vunpack.c.h.b16 %v388
    %v1057 = vunpack.c.l.b16 %v389
    %v1058 = vunpack.c.h.b16 %v389
    %v1059 = vunpack.c.l.b16 %v390
    %v1060 = vunpack.c.h.b16 %v390
    %v1061 = vunpack.c.l.b16 %v391
    %v1062 = vunpack.c.h.b16 %v391
    %v1063 = vunpack.c.l.b16 %v392
    %v1064 = vunpack.c.h.b16 %v392
    %v1065 = vunpack.c.l.b16 %v393
    %v1066 = vunpack.c.h.b16 %v393
    %v1067 = vunpack.c.l.b16 %v394
    %v1068 = vunpack.c.h.b16 %v394
    %v1069 = vunpack.c.l.b16 %v395
    %v1070 = vunpack.c.h.b16 %v395
    %v1071 = vunpack.c.l.b16 %v396
    %v1072 = vunpack.c.h.b16 %v396
    %v1073 = vunpack.c.l.b16 %v397
    %v1074 = vunpack.c.h.b16 %v397
    %v1075 = vunpack.c.l.b16 %v398
    %v1076 = vunpack.c.h.b16 %v398
    %v1077 = vunpack.c.l.b16 %v399
    %v1078 = vunpack.c.h.b16 %v399
    %v1079 = vunpack.c.l.b16 %v400
    %v1080 = vunpack.c.h.b16 %v400
    %v1081 = vunpack.c.l.b16 %v401
    %v1082 = vunpack.c.h.b16 %v401
    %v1083 = vunpack.c.l.b16 %v402
    %v1084 = vunpack.c.h.b16 %v402
    %v1085 = vunpack.c.l.b16 %v403
    %v1086 = vunpack.c.h.b16 %v403
    %v1087 = vunpack.c.l.b16 %v404
    %v1088 = vunpack.c.h.b16 %v404
    %v1089 = vunpack.c.l.b16 %v405
    %v1090 = vunpack.c.h.b16 %v405
    %v1091 = vunpack.c.l.b16 %v406
    %v1092 = vunpack.c.h.b16 %v406
    %v1093 = vunpack.c.l.b16 %v407
    %v1094 = vunpack.c.h.b16 %v407
    %v1095 = vunpack.c.l.b16 %v408
    %v1096 = vunpack.c.h.b16 %v408
    %v1097 = vunpack.c.l.b16 %v409
    %v1098 = vunpack.c.h.b16 %v409
    %v1099 = vunpack.c.l.b16 %v410
    %v1100 = vunpack.c.h.b16 %v410
    %v1101 = vunpack.c.l.b16 %v411
    %v1102 = vunpack.c.h.b16 %v411
    %v1103 = vunpack.c.l.b16 %v412
    %v1104 = vunpack.c.h.b16 %v412
    %v1105 = vunpack.c.l.b16 %v413
    %v1106 = vunpack.c.h.b16 %v413
    %v1107 = vunpack.c.l.b16 %v414
    %v1108 = vunpack.c.h.b16 %v414
    %v1109 = vunpack.c.l.b16 %v415
    %v1110 = vunpack.c.h.b16 %v415
    %v1111 = vunpack.c.l.b16 %v416
    %v1112 = vunpack.c.h.b16 %v416
    %v1113 = vunpack.c.l.b16 %v417
    %v1114 = vunpack.c.h.b16 %v417
    %v1115 = vunpack.c.l.b16 %v418
    %v1116 = vunpack.c.h.b16 %v418
    %v1117 = vunpack.c.l.b16 %v419
    %v1118 = vunpack.c.h.b16 %v419
    %v1119 = vunpack.c.l.b16 %v420
    %v1120 = vunpack.c.h.b16 %v420
    %v1121 = vunpack.c.l.b16 %v421
    %v1122 = vunpack.c.h.b16 %v421
    %v1123 = vunpack.c.l.b16 %v422
    %v1124 = vunpack.c.h.b16 %v422
    %v1125 = vunpack.c.l.b16 %v423
    %v1126 = vunpack.c.h.b16 %v423
    %v1127 = vunpack.c.l.b16 %v424
    %v1128 = vunpack.c.h.b16 %v424
    %v1129 = vunpack.c.l.b16 %v425
    %v1130 = vunpack.c.h.b16 %v425
    %v1131 = vunpack.c.l.b16 %v426
    %v1132 = vunpack.c.h.b16 %v426
    %v1133 = vunpack.c.l.b16 %v427
    %v1134 = vunpack.c.h.b16 %v427
    %v1135 = vunpack.c.l.b16 %v428
    %v1136 = vunpack.c.h.b16 %v428
    %v1137 = vunpack.c.l.b16 %v429
    %v1138 = vunpack.c.h.b16 %v429
    %v1139 = vunpack.c.l.b16 %v430
    %v1140 = vunpack.c.h.b16 %v430
    %v1141 = vunpack.c.l.b16 %v431
    %v1142 = vunpack.c.h.b16 %v431
    %v1143 = vunpack.c.l.b16 %v432
    %v1144 = vunpack.c.h.b16 %v432
    %v1145 = vunpack.c.l.b16 %v433
    %v1146 = vunpack.c.h.b16 %v433
    %v1147 = vunpack.c.l.b16 %v434
    %v1148 = vunpack.c.h.b16 %v434
    %v1149 = vunpack.c.l.b16 %v435
    %v1150 = vunpack.c.h.b16 %v435
    %v1151 = vunpack.c.l.b16 %v436
    %v1152 = vunpack.c.h.b16 %v436
    %v1153 = vunpack.c.l.b16 %v437
    %v1154 = vunpack.c.h.b16 %v437
    %v1155 = vunpack.c.l.b16 %v438
    %v1156 = vunpack.c.h.b16 %v438
    %v1157 = vunpack.c.l.b16 %v439
    %v1158 = vunpack.c.h.b16 %v439
    %v1159 = vunpack.c.l.b16 %v440
    %v1160 = vunpack.c.h.b16 %v440
    %v1161 = vunpack.c.l.b16 %v441
    %v1162 = vunpack.c.h.b16 %v441
    %v1163 = vunpack.c.l.b16 %v442
    %v1164 = vunpack.c.h.b16 %v442
    %v1165 = vunpack.c.l.b16 %v443
    %v1166 = vunpack.c.h.b16 %v443
    %v1167 = vunpack.c.l.b16 %v444
    %v1168 = vunpack.c.h.b16 %v444
    %v1169 = vunpack.c.l.b16 %v445
    %v1170 = vunpack.c.h.b16 %v445
    %v1171 = vunpack.c.l.b16 %v446
    %v1172 = vunpack.c.h.b16 %v446
    %v1173 = vunpack.c.l.b16 %v447
    %v1174 = vunpack.c.h.b16 %v447
    %v1175 = vunpack.c.l.b16 %v448
    %v1176 = vunpack.c.h.b16 %v448
    %v1177 = vunpack.c.l.b16 %v449
    %v1178 = vunpack.c.h.b16 %v449
    %v1179 = vunpack.c.l.b16 %v450
    %v1180 = vunpack.c.h.b16 %v450
    %v1181 = vunpack.c.l.b16 %v451
    %v1182 = vunpack.c.h.b16 %v451
    %v1183 = vunpack.c.l.b16 %v452
    %v1184 = vunpack.c.h.b16 %v452
    %v1185 = vunpack.c.l.b16 %v453
    %v1186 = vunpack.c.h.b16 %v453
    %v1187 = vunpack.c.l.b16 %v454
    %v1188 = vunpack.c.h.b16 %v454
    %v1189 = vunpack.c.l.b16 %v455
    %v1190 = vunpack.c.h.b16 %v455
    %v1191 = vunpack.c.l.b16 %v456
    %v1192 = vunpack.c.h.b16 %v456
    %v1193 = vunpack.c.l.b16 %v457
    %v1194 = vunpack.c.h.b16 %v457
    %v1195 = vunpack.c.l.b16 %v458
    %v1196 = vunpack.c.h.b16 %v458
    %v1197 = vunpack.c.l.b16 %v459
    %v1198 = vunpack.c.h.b16 %v459
    %v1199 = vunpack.c.l.b16 %v460
    %v1200 = vunpack.c.h.b16 %v460
    %v1201 = vunpack.c.l.b16 %v461
    %v1202 = vunpack.c.h.b16 %v461
    %v1203 = vunpack.c.l.b16 %v462
    %v1204 = vunpack.c.h.b16 %v462
    %v1205 = vunpack.c.l.b16 %v463
    %v1206 = vunpack.c.h.b16 %v463
    %v1207 = vunpack.c.l.b16 %v464
    %v1208 = vunpack.c.h.b16 %v464
    %v1209 = vunpack.c.l.b16 %v465
    %v1210 = vunpack.c.h.b16 %v465
    %v1211 = vunpack.c.l.b16 %v466
    %v1212 = vunpack.c.h.b16 %v466
    %v1213 = vunpack.c.l.b16 %v467
    %v1214 = vunpack.c.h.b16 %v467
    %v1215 = vunpack.c.l.b16 %v468
    %v1216 = vunpack.c.h.b16 %v468
    %v1217 = vunpack.c.l.b16 %v469
    %v1218 = vunpack.c.h.b16 %v469
    %v1219 = vunpack.c.l.b16 %v470
    %v1220 = vunpack.c.h.b16 %v470
    %v1221 = vunpack.c.l.b16 %v471
    %v1222 = vunpack.c.h.b16 %v471
    %v1223 = vunpack.c.l.b16 %v472
    %v1224 = vunpack.c.h.b16 %v472
    %v1225 = vunpack.c.l.b16 %v473
    %v1226 = vunpack.c.h.b16 %v473
    %v1227 = vunpack.c.l.b16 %v474
    %v1228 = vunpack.c.h.b16 %v474
    %v1229 = vunpack.c.l.b16 %v475
    %v1230 = vunpack.c.h.b16 %v475
    %v1231 = vunpack.c.l.b16 %v476
    %v1232 = vunpack.c.h.b16 %v476
    %v1233 = vunpack.c.l.b16 %v477
    %v1234 = vunpack.c.h.b16 %v477
    %v1235 = vunpack.c.l.b16 %v478
    %v1236 = vunpack.c.h.b16 %v478
    %v1237 = vunpack.c.l.b16 %v479
    %v1238 = vunpack.c.h.b16 %v479
    %v1239 = vunpack.c.l.b16 %v480
    %v1240 = vunpack.c.h.b16 %v480
    %v1241 = vunpack.c.l.b16 %v481
    %v1242 = vunpack.c.h.b16 %v481
    %v1243 = vunpack.c.l.b16 %v482
    %v1244 = vunpack.c.h.b16 %v482
    %v1245 = vunpack.c.l.b16 %v483
    %v1246 = vunpack.c.h.b16 %v483
    %v1247 = vunpack.c.l.b16 %v484
    %v1248 = vunpack.c.h.b16 %v484
    %v1249 = vunpack.c.l.b16 %v485
    %v1250 = vunpack.c.h.b16 %v485
    %v1251 = vunpack.c.l.b16 %v486
    %v1252 = vunpack.c.h.b16 %v486
    %v1253 = vunpack.c.l.b16 %v487
    %v1254 = vunpack.c.h.b16 %v487
    %v1255 = vunpack.c.l.b16 %v488
    %v1256 = vunpack.c.h.b16 %v488
    %v1257 = vunpack.c.l.b16 %v489
    %v1258 = vunpack.c.h.b16 %v489
    %v1259 = vunpack.c.l.b16 %v490
    %v1260 = vunpack.c.h.b16 %v490
    %v1261 = vunpack.c.l.b16 %v491
    %v1262 = vunpack.c.h.b16 %v491
    %v1263 = vunpack.c.l.b16 %v492
    %v1264 = vunpack.c.h.b16 %v492
    %v1265 = vunpack.c.l.b16 %v493
    %v1266 = vunpack.c.h.b16 %v493
    %v1267 = vunpack.c.l.b16 %v494
    %v1268 = vunpack.c.h.b16 %v494
    %v1269 = vunpack.c.l.b16 %v495
    %v1270 = vunpack.c.h.b16 %v495
    %v1271 = vunpack.c.l.b16 %v496
    %v1272 = vunpack.c.h.b16 %v496
    %v1273 = vunpack.c.l.b16 %v497
    %v1274 = vunpack.c.h.b16 %v497
    %v1275 = vunpack.c.l.b16 %v498
    %v1276 = vunpack.c.h.b16 %v498
    %v1277 = vunpack.c.l.b16 %v499
    %v1278 = vunpack.c.h.b16 %v499
    %v1279 = vunpack.c.l.b16 %v500
    %v1280 = vunpack.c.h.b16 %v500
    %v1281 = vunpack.c.l.b16 %v501
    %v1282 = vunpack.c.h.b16 %v501
    %v1283 = vunpack.c.l.b16 %v502
    %v1284 = vunpack.c.h.b16 %v502
    %v1285 = vpack.c.b16 %v777, %v773
    %v1286 = vpack.c.b16 %v778, %v774
    %v1287 = vpack.c.b16 %v779, %v775
    %v1288 = vpack.c.b16 %v780, %v776
    %v1289 = vpack.c.b16 %v785, %v781
    %v1290 = vpack.c.b16 %v786, %v782
    %v1291 = vpack.c.b16 %v787, %v783
    %v1292 = vpack.c.b16 %v788, %v784
    %v1293 = vpack.c.b16 %v793, %v789
    %v1294 = vpack.c.b16 %v794, %v790
    %v1295 = vpack.c.b16 %v795, %v791
    %v1296 = vpack.c.b16 %v796, %v792
    %v1297 = vpack.c.b16 %v801, %v797
    %v1298 = vpack.c.b16 %v802, %v798
    %v1299 = vpack.c.b16 %v803, %v799
    %v1300 = vpack.c.b16 %v804, %v800
    %v1301 = vpack.c.b16 %v809, %v805
    %v1302 = vpack.c.b16 %v810, %v806
    %v1303 = vpack.c.b16 %v811, %v807
    %v1304 = vpack.c.b16 %v812, %v808
    %v1305 = vpack.c.b16 %v817, %v813
    %v1306 = vpack.c.b16 %v818, %v814
    %v1307 = vpack.c.b16 %v819, %v815
    %v1308 = vpack.c.b16 %v820, %v816
    %v1309 = vpack.c.b16 %v825, %v821
    %v1310 = vpack.c.b16 %v826, %v822
    %v1311 = vpack.c.b16 %v827, %v823
    %v1312 = vpack.c.b16 %v828, %v824
    %v1313 = vpack.c.b16 %v833, %v829
    %v1314 = vpack.c.b16 %v834, %v830
    %v1315 = vpack.c.b16 %v835, %v831
    %v1316 = vpack.c.b16 %v836, %v832
    %v1317 = vpack.c.b16 %v841, %v837
    %v1318 = vpack.c.b16 %v842, %v838
    %v1319 = vpack.c.b16 %v843, %v839
    %v1320 = vpack.c.b16 %v844, %v840
    %v1321 = vpack.c.b16 %v849, %v845
    %v1322 = vpack.c.b16 %v850, %v846
    %v1323 = vpack.c.b16 %v851, %v847
    %v1324 = vpack.c.b16 %v852, %v848
    %v1325 = vpack.c.b16 %v857, %v853
    %v1326 = vpack.c.b16 %v858, %v854
    %v1327 = vpack.c.b16 %v859, %v855
    %v1328 = vpack.c.b16 %v860, %v856
    %v1329 = vpack.c.b16 %v865, %v861
    %v1330 = vpack.c.b16 %v866, %v862
    %v1331 = vpack.c.b16 %v867, %v863
    %v1332 = vpack.c.b16 %v868, %v864
    %v1333 = vpack.c.b16 %v873, %v869
    %v1334 = vpack.c.b16 %v874, %v870
    %v1335 = vpack.c.b16 %v875, %v871
    %v1336 = vpack.c.b16 %v876, %v872
    %v1337 = vpack.c.b16 %v881, %v877
    %v1338 = vpack.c.b16 %v882, %v878
    %v1339 = vpack.c.b16 %v883, %v879
    %v1340 = vpack.c.b16 %v884, %v880
    %v1341 = vpack.c.b16 %v889, %v885
    %v1342 = vpack.c.b16 %v890, %v886
    %v1343 = vpack.c.b16 %v891, %v887
    %v1344 = vpack.c.b16 %v892, %v888
    %v1345 = vpack.c.b16 %v897, %v893
    %v1346 = vpack.c.b16 %v898, %v894
    %v1347 = vpack.c.b16 %v899, %v895
    %v1348 = vpack.c.b16 %v900, %v896
    %v1349 = vpack.c.b16 %v905, %v901
    %v1350 = vpack.c.b16 %v906, %v902
    %v1351 = vpack.c.b16 %v907, %v903
    %v1352 = vpack.c.b16 %v908, %v904
    %v1353 = vpack.c.b16 %v913, %v909
    %v1354 = vpack.c.b16 %v914, %v910
    %v1355 = vpack.c.b16 %v915, %v911
    %v1356 = vpack.c.b16 %v916, %v912
    %v1357 = vpack.c.b16 %v921, %v917
    %v1358 = vpack.c.b16 %v922, %v918
    %v1359 = vpack.c.b16 %v923, %v919
    %v1360 = vpack.c.b16 %v924, %v920
    %v1361 = vpack.c.b16 %v929, %v925
    %v1362 = vpack.c.b16 %v930, %v926
    %v1363 = vpack.c.b16 %v931, %v927
    %v1364 = vpack.c.b16 %v932, %v928
    %v1365 = vpack.c.b16 %v937, %v933
    %v1366 = vpack.c.b16 %v938, %v934
    %v1367 = vpack.c.b16 %v939, %v935
    %v1368 = vpack.c.b16 %v940, %v936
    %v1369 = vpack.c.b16 %v945, %v941
    %v1370 = vpack.c.b16 %v946, %v942
    %v1371 = vpack.c.b16 %v947, %v943
    %v1372 = vpack.c.b16 %v948, %v944
    %v1373 = vpack.c.b16 %v953, %v949
    %v1374 = vpack.c.b16 %v954, %v950
    %v1375 = vpack.c.b16 %v955, %v951
    %v1376 = vpack.c.b16 %v956, %v952
    %v1377 = vpack.c.b16 %v961, %v957
    %v1378 = vpack.c.b16 %v962, %v958
    %v1379 = vpack.c.b16 %v963, %v959
    %v1380 = vpack.c.b16 %v964, %v960
    %v1381 = vpack.c.b16 %v969, %v965
    %v1382 = vpack.c.b16 %v970, %v966
    %v1383 = vpack.c.b16 %v971, %v967
    %v1384 = vpack.c.b16 %v972, %v968
    %v1385 = vpack.c.b16 %v977, %v973
    %v1386 = vpack.c.b16 %v978, %v974
    %v1387 = vpack.c.b16 %v979, %v975
    %v1388 = vpack.c.b16 %v980, %v976
    %v1389 = vpack.c.b16 %v985, %v981
    %v1390 = vpack.c.b16 %v986, %v982
    %v1391 = vpack.c.b16 %v987, %v983
    %v1392 = vpack.c.b16 %v988, %v984
    %v1393 = vpack.c.b16 %v993, %v989
    %v1394 = vpack.c.b16 %v994, %v990
    %v1395 = vpack.c.b16 %v995, %v991
    %v1396 = vpack.c.b16 %v996, %v992
    %v1397 = vpack.c.b16 %v1001, %v997
    %v1398 = vpack.c.b16 %v1002, %v998
    %v1399 = vpack.c.b16 %v1003, %v999
    %v1400 = vpack.c.b16 %v1004, %v1000
    %v1401 = vpack.c.b16 %v1009, %v1005
    %v1402 = vpack.c.b16 %v1010, %v1006
    %v1403 = vpack.c.b16 %v1011, %v1007
    %v1404 = vpack.c.b16 %v1012, %v1008
    %v1405 = vpack.c.b16 %v1017, %v1013
    %v1406 = vpack.c.b16 %v1018, %v1014
    %v1407 = vpack.c.b16 %v1019, %v1015
    %v1408 = vpack.c.b16 %v1020, %v1016
    %v1409 = vpack.c.b16 %v1025, %v1021
    %v1410 = vpack.c.b16 %v1026, %v1022
    %v1411 = vpack.c.b16 %v1027, %v1023
    %v1412 = vpack.c.b16 %v1028, %v1024
    %v1413 = vpack.c.b16 %v1033, %v1029
    %v1414 = vpack.c.b16 %v1034, %v1030
    %v1415 = vpack.c.b16 %v1035, %v1031
    %v1416 = vpack.c.b16 %v1036, %v1032
    %v1417 = vpack.c.b16 %v1041, %v1037
    %v1418 = vpack.c.b16 %v1042, %v1038
    %v1419 = vpack.c.b16 %v1043, %v1039
    %v1420 = vpack.c.b16 %v1044, %v1040
    %v1421 = vpack.c.b16 %v1049, %v1045
    %v1422 = vpack.c.b16 %v1050, %v1046
    %v1423 = vpack.c.b16 %v1051, %v1047
    %v1424 = vpack.c.b16 %v1052, %v1048
    %v1425 = vpack.c.b16 %v1057, %v1053
    %v1426 = vpack.c.b16 %v1058, %v1054
    %v1427 = vpack.c.b16 %v1059, %v1055
    %v1428 = vpack.c.b16 %v1060, %v1056
    %v1429 = vpack.c.b16 %v1065, %v1061
    %v1430 = vpack.c.b16 %v1066, %v1062
    %v1431 = vpack.c.b16 %v1067, %v1063
    %v1432 = vpack.c.b16 %v1068, %v1064
    %v1433 = vpack.c.b16 %v1073, %v1069
    %v1434 = vpack.c.b16 %v1074, %v1070
    %v1435 = vpack.c.b16 %v1075, %v1071
    %v1436 = vpack.c.b16 %v1076, %v1072
    %v1437 = vpack.c.b16 %v1081, %v1077
    %v1438 = vpack.c.b16 %v1082, %v1078
    %v1439 = vpack.c.b16 %v1083, %v1079
    %v1440 = vpack.c.b16 %v1084, %v1080
    %v1441 = vpack.c.b16 %v1089, %v1085
    %v1442 = vpack.c.b16 %v1090, %v1086
    %v1443 = vpack.c.b16 %v1091, %v1087
    %v1444 = vpack.c.b16 %v1092, %v1088
    %v1445 = vpack.c.b16 %v1097, %v1093
    %v1446 = vpack.c.b16 %v1098, %v1094
    %v1447 = vpack.c.b16 %v1099, %v1095
    %v1448 = vpack.c.b16 %v1100, %v1096
    %v1449 = vpack.c.b16 %v1105, %v1101
    %v1450 = vpack.c.b16 %v1106, %v1102
    %v1451 = vpack.c.b16 %v1107, %v1103
    %v1452 = vpack.c.b16 %v1108, %v1104
    %v1453 = vpack.c.b16 %v1113, %v1109
    %v1454 = vpack.c.b16 %v1114, %v1110
    %v1455 = vpack.c.b16 %v1115, %v1111
    %v1456 = vpack.c.b16 %v1116, %v1112
    %v1457 = vpack.c.b16 %v1121, %v1117
    %v1458 = vpack.c.b16 %v1122, %v1118
    %v1459 = vpack.c.b16 %v1123, %v1119
    %v1460 = vpack.c.b16 %v1124, %v1120
    %v1461 = vpack.c.b16 %v1129, %v1125
    %v1462 = vpack.c.b16 %v1130, %v1126
    %v1463 = vpack.c.b16 %v1131, %v1127
    %v1464 = vpack.c.b16 %v1132, %v1128
    %v1465 = vpack.c.b16 %v1137, %v1133
    %v1466 = vpack.c.b16 %v1138, %v1134
    %v1467 = vpack.c.b16 %v1139, %v1135
    %v1468 = vpack.c.b16 %v1140, %v1136
    %v1469 = vpack.c.b16 %v1145, %v1141
    %v1470 = vpack.c.b16 %v1146, %v1142
    %v1471 = vpack.c.b16 %v1147, %v1143
    %v1472 = vpack.c.b16 %v1148, %v1144
    %v1473 = vpack.c.b16 %v1153, %v1149
    %v1474 = vpack.c.b16 %v1154, %v1150
    %v1475 = vpack.c.b16 %v1155, %v1151
    %v1476 = vpack.c.b16 %v1156, %v1152
    %v1477 = vpack.c.b16 %v1161, %v1157
    %v1478 = vpack.c.b16 %v1162, %v1158
    %v1479 = vpack.c.b16 %v1163, %v1159
    %v1480 = vpack.c.b16 %v1164, %v1160
    %v1481 = vpack.c.b16 %v1169, %v1165
    %v1482 = vpack.c.b16 %v1170, %v1166
    %v1483 = vpack.c.b16 %v1171, %v1167
    %v1484 = vpack.c.b16 %v1172, %v1168
    %v1485 = vpack.c.b16 %v1177, %v1173
    %v1486 = vpack.c.b16 %v1178, %v1174
    %v1487 = vpack.c.b16 %v1179, %v1175
    %v1488 = vpack.c.b16 %v1180, %v1176
    %v1489 = vpack.c.b16 %v1185, %v1181
    %v1490 = vpack.c.b16 %v1186, %v1182
    %v1491 = vpack.c.b16 %v1187, %v1183
    %v1492 = vpack.c.b16 %v1188, %v1184
    %v1493 = vpack.c.b16 %v1193, %v1189
    %v1494 = vpack.c.b16 %v1194, %v1190
    %v1495 = vpack.c.b16 %v1195, %v1191
    %v1496 = vpack.c.b16 %v1196, %v1192
    %v1497 = vpack.c.b16 %v1201, %v1197
    %v1498 = vpack.c.b16 %v1202, %v1198
    %v1499 = vpack.c.b16 %v1203, %v1199
    %v1500 = vpack.c.b16 %v1204, %v1200
    %v1501 = vpack.c.b16 %v1209, %v1205
    %v1502 = vpack.c.b16 %v1210, %v1206
    %v1503 = vpack.c.b16 %v1211, %v1207
    %v1504 = vpack.c.b16 %v1212, %v1208
    %v1505 = vpack.c.b16 %v1217, %v1213
    %v1506 = vpack.c.b16 %v1218, %v1214
    %v1507 = vpack.c.b16 %v1219, %v1215
    %v1508 = vpack.c.b16 %v1220, %v1216
    %v1509 = vpack.c.b16 %v1225, %v1221
    %v1510 = vpack.c.b16 %v1226, %v1222
    %v1511 = vpack.c.b16 %v1227, %v1223
    %v1512 = vpack.c.b16 %v1228, %v1224
    %v1513 = vpack.c.b16 %v1233, %v1229
    %v1514 = vpack.c.b16 %v1234, %v1230
    %v1515 = vpack.c.b16 %v1235, %v1231
    %v1516 = vpack.c.b16 %v1236, %v1232
    %v1517 = vpack.c.b16 %v1241, %v1237
    %v1518 = vpack.c.b16 %v1242, %v1238
    %v1519 = vpack.c.b16 %v1243, %v1239
    %v1520 = vpack.c.b16 %v1244, %v1240
    %v1521 = vpack.c.b16 %v1249, %v1245
    %v1522 = vpack.c.b16 %v1250, %v1246
    %v1523 = vpack.c.b16 %v1251, %v1247
    %v1524 = vpack.c.b16 %v1252, %v1248
    %v1525 = vpack.c.b16 %v1257, %v1253
    %v1526 = vpack.c.b16 %v1258, %v1254
    %v1527 = vpack.c.b16 %v1259, %v1255
    %v1528 = vpack.c.b16 %v1260, %v1256
    %v1529 = vpack.c.b16 %v1265, %v1261
    %v1530 = vpack.c.b16 %v1266, %v1262
    %v1531 = vpack.c.b16 %v1267, %v1263
    %v1532 = vpack.c.b16 %v1268, %v1264
    %v1533 = vpack.c.b16 %v1273, %v1269
    %v1534 = vpack.c.b16 %v1274, %v1270
    %v1535 = vpack.c.b16 %v1275, %v1271
    %v1536 = vpack.c.b16 %v1276, %v1272
    %v1537 = vpack.c.b16 %v1281, %v1277
    %v1538 = vpack.c.b16 %v1282, %v1278
    %v1539 = vpack.c.b16 %v1283, %v1279
    %v1540 = vpack.c.b16 %v1284, %v1280
    %1797 = vmatpush.bf16.msra.mxu0 %v1313
    %1798 = vmatpush.bf16.msra.mxu0 %v1309
    %1799 = vmatpush.bf16.msra.mxu0 %v1305
    %1800 = vmatpush.bf16.msra.mxu0 %v1301
    %1801 = vmatpush.bf16.msra.mxu0 %v1297
    %1802 = vmatpush.bf16.msra.mxu0 %v1293
    %1803 = vmatpush.bf16.msra.mxu0 %v1289
    %1804 = vmatpush.bf16.msra.mxu0 %v1285
    %1805 = vmatmul.bf16.gmra.mxu0 %v239
    %v1806 = vpop.f32.mrf.mxu0
    %v1807 = vadd.f32 %v513, %v1806
    %v1808 = vpop.f32.mrf.mxu0
    %1809 = vdwg.mxu0
    %1810 = vmatpush.bf16.msra.mxu0 %v1345
    %1811 = vmatpush.bf16.msra.mxu0 %v1341
    %1812 = vmatpush.bf16.msra.mxu0 %v1337
    %1813 = vmatpush.bf16.msra.mxu0 %v1333
    %1814 = vmatpush.bf16.msra.mxu0 %v1329
    %1815 = vmatpush.bf16.msra.mxu0 %v1325
    %1816 = vmatpush.bf16.msra.mxu0 %v1321
    %1817 = vmatpush.bf16.msra.mxu0 %v1317
    %1818 = vmatmul.bf16.gmra.mxu0 %v240
    %v1819 = vpop.f32.mrf.mxu0
    %v1820 = vadd.f32 %v1807, %v1819
    %v1821 = vpop.f32.mrf.mxu0
    %1822 = vdwg.mxu0
    %1823 = vmatpush.bf16.msra.mxu0 %v1377
    %1824 = vmatpush.bf16.msra.mxu0 %v1373
    %1825 = vmatpush.bf16.msra.mxu0 %v1369
    %1826 = vmatpush.bf16.msra.mxu0 %v1365
    %1827 = vmatpush.bf16.msra.mxu0 %v1361
    %1828 = vmatpush.bf16.msra.mxu0 %v1357
    %1829 = vmatpush.bf16.msra.mxu0 %v1353
    %1830 = vmatpush.bf16.msra.mxu0 %v1349
    %1831 = vmatmul.bf16.gmra.mxu0 %v241
    %v1832 = vpop.f32.mrf.mxu0
    %v1833 = vadd.f32 %v1820, %v1832
    %v1834 = vpop.f32.mrf.mxu0
    %1835 = vdwg.mxu0
    %1836 = vmatpush.bf16.msra.mxu0 %v1409
    %1837 = vmatpush.bf16.msra.mxu0 %v1405
    %1838 = vmatpush.bf16.msra.mxu0 %v1401
    %1839 = vmatpush.bf16.msra.mxu0 %v1397
    %1840 = vmatpush.bf16.msra.mxu0 %v1393
    %1841 = vmatpush.bf16.msra.mxu0 %v1389
    %1842 = vmatpush.bf16.msra.mxu0 %v1385
    %1843 = vmatpush.bf16.msra.mxu0 %v1381
    %1844 = vmatmul.bf16.gmra.mxu0 %v242
    %v1845 = vpop.f32.mrf.mxu0
    %v1846 = vadd.f32 %v1833, %v1845
    %v1847 = vpop.f32.mrf.mxu0
    %1848 = vdwg.mxu0
    %1849 = vmatpush.bf16.msra.mxu0 %v1441
    %1850 = vmatpush.bf16.msra.mxu0 %v1437
    %1851 = vmatpush.bf16.msra.mxu0 %v1433
    %1852 = vmatpush.bf16.msra.mxu0 %v1429
    %1853 = vmatpush.bf16.msra.mxu0 %v1425
    %1854 = vmatpush.bf16.msra.mxu0 %v1421
    %1855 = vmatpush.bf16.msra.mxu0 %v1417
    %1856 = vmatpush.bf16.msra.mxu0 %v1413
    %1857 = vmatmul.bf16.gmra.mxu0 %v243
    %v1858 = vpop.f32.mrf.mxu0
    %v1859 = vadd.f32 %v1846, %v1858
    %v1860 = vpop.f32.mrf.mxu0
    %1861 = vdwg.mxu0
    %1862 = vmatpush.bf16.msra.mxu0 %v1473
    %1863 = vmatpush.bf16.msra.mxu0 %v1469
    %1864 = vmatpush.bf16.msra.mxu0 %v1465
    %1865 = vmatpush.bf16.msra.mxu0 %v1461
    %1866 = vmatpush.bf16.msra.mxu0 %v1457
    %1867 = vmatpush.bf16.msra.mxu0 %v1453
    %1868 = vmatpush.bf16.msra.mxu0 %v1449
    %1869 = vmatpush.bf16.msra.mxu0 %v1445
    %1870 = vmatmul.bf16.gmra.mxu0 %v244
    %v1871 = vpop.f32.mrf.mxu0
    %v1872 = vadd.f32 %v1859, %v1871
    %v1873 = vpop.f32.mrf.mxu0
    %1874 = vdwg.mxu0
    %1875 = vmatpush.bf16.msra.mxu0 %v1505
    %1876 = vmatpush.bf16.msra.mxu0 %v1501
    %1877 = vmatpush.bf16.msra.mxu0 %v1497
    %1878 = vmatpush.bf16.msra.mxu0 %v1493
    %1879 = vmatpush.bf16.msra.mxu0 %v1489
    %1880 = vmatpush.bf16.msra.mxu0 %v1485
    %1881 = vmatpush.bf16.msra.mxu0 %v1481
    %1882 = vmatpush.bf16.msra.mxu0 %v1477
    %1883 = vmatmul.bf16.gmra.mxu0 %v245
    %v1884 = vpop.f32.mrf.mxu0
    %v1885 = vadd.f32 %v1872, %v1884
    %v1886 = vpop.f32.mrf.mxu0
    %1887 = vdwg.mxu0
    %1888 = vmatpush.bf16.msra.mxu0 %v1537
    %1889 = vmatpush.bf16.msra.mxu0 %v1533
    %1890 = vmatpush.bf16.msra.mxu0 %v1529
    %1891 = vmatpush.bf16.msra.mxu0 %v1525
    %1892 = vmatpush.bf16.msra.mxu0 %v1521
    %1893 = vmatpush.bf16.msra.mxu0 %v1517
    %1894 = vmatpush.bf16.msra.mxu0 %v1513
    %1895 = vmatpush.bf16.msra.mxu0 %v1509
    %1896 = vmatmul.bf16.gmra.mxu0 %v246
    %v1897 = vpop.f32.mrf.mxu0
    %v1898 = vadd.f32 %v1885, %v1897
    %v1899 = vpop.f32.mrf.mxu0
    %1900 = vdwg.mxu0
    %1901 = vmatpush.bf16.msra.mxu0 %v1314
    %1902 = vmatpush.bf16.msra.mxu0 %v1310
    %1903 = vmatpush.bf16.msra.mxu0 %v1306
    %1904 = vmatpush.bf16.msra.mxu0 %v1302
    %1905 = vmatpush.bf16.msra.mxu0 %v1298
    %1906 = vmatpush.bf16.msra.mxu0 %v1294
    %1907 = vmatpush.bf16.msra.mxu0 %v1290
    %1908 = vmatpush.bf16.msra.mxu0 %v1286
    %1909 = vmatmul.bf16.gmra.mxu0 %v239
    %v1910 = vpop.f32.mrf.mxu0
    %v1911 = vadd.f32 %v514, %v1910
    %v1912 = vpop.f32.mrf.mxu0
    %1913 = vdwg.mxu0
    %1914 = vmatpush.bf16.msra.mxu0 %v1346
    %1915 = vmatpush.bf16.msra.mxu0 %v1342
    %1916 = vmatpush.bf16.msra.mxu0 %v1338
    %1917 = vmatpush.bf16.msra.mxu0 %v1334
    %1918 = vmatpush.bf16.msra.mxu0 %v1330
    %1919 = vmatpush.bf16.msra.mxu0 %v1326
    %1920 = vmatpush.bf16.msra.mxu0 %v1322
    %1921 = vmatpush.bf16.msra.mxu0 %v1318
    %1922 = vmatmul.bf16.gmra.mxu0 %v240
    %v1923 = vpop.f32.mrf.mxu0
    %v1924 = vadd.f32 %v1911, %v1923
    %v1925 = vpop.f32.mrf.mxu0
    %1926 = vdwg.mxu0
    %1927 = vmatpush.bf16.msra.mxu0 %v1378
    %1928 = vmatpush.bf16.msra.mxu0 %v1374
    %1929 = vmatpush.bf16.msra.mxu0 %v1370
    %1930 = vmatpush.bf16.msra.mxu0 %v1366
    %1931 = vmatpush.bf16.msra.mxu0 %v1362
    %1932 = vmatpush.bf16.msra.mxu0 %v1358
    %1933 = vmatpush.bf16.msra.mxu0 %v1354
    %1934 = vmatpush.bf16.msra.mxu0 %v1350
    %1935 = vmatmul.bf16.gmra.mxu0 %v241
    %v1936 = vpop.f32.mrf.mxu0
    %v1937 = vadd.f32 %v1924, %v1936
    %v1938 = vpop.f32.mrf.mxu0
    %1939 = vdwg.mxu0
    %1940 = vmatpush.bf16.msra.mxu0 %v1410
    %1941 = vmatpush.bf16.msra.mxu0 %v1406
    %1942 = vmatpush.bf16.msra.mxu0 %v1402
    %1943 = vmatpush.bf16.msra.mxu0 %v1398
    %1944 = vmatpush.bf16.msra.mxu0 %v1394
    %1945 = vmatpush.bf16.msra.mxu0 %v1390
    %1946 = vmatpush.bf16.msra.mxu0 %v1386
    %1947 = vmatpush.bf16.msra.mxu0 %v1382
    %1948 = vmatmul.bf16.gmra.mxu0 %v242
    %v1949 = vpop.f32.mrf.mxu0
    %v1950 = vadd.f32 %v1937, %v1949
    %v1951 = vpop.f32.mrf.mxu0
    %1952 = vdwg.mxu0
    %1953 = vmatpush.bf16.msra.mxu0 %v1442
    %1954 = vmatpush.bf16.msra.mxu0 %v1438
    %1955 = vmatpush.bf16.msra.mxu0 %v1434
    %1956 = vmatpush.bf16.msra.mxu0 %v1430
    %1957 = vmatpush.bf16.msra.mxu0 %v1426
    %1958 = vmatpush.bf16.msra.mxu0 %v1422
    %1959 = vmatpush.bf16.msra.mxu0 %v1418
    %1960 = vmatpush.bf16.msra.mxu0 %v1414
    %1961 = vmatmul.bf16.gmra.mxu0 %v243
    %v1962 = vpop.f32.mrf.mxu0
    %v1963 = vadd.f32 %v1950, %v1962
    %v1964 = vpop.f32.mrf.mxu0
    %1965 = vdwg.mxu0
    %1966 = vmatpush.bf16.msra.mxu0 %v1474
    %1967 = vmatpush.bf16.msra.mxu0 %v1470
    %1968 = vmatpush.bf16.msra.mxu0 %v1466
    %1969 = vmatpush.bf16.msra.mxu0 %v1462
    %1970 = vmatpush.bf16.msra.mxu0 %v1458
    %1971 = vmatpush.bf16.msra.mxu0 %v1454
    %1972 = vmatpush.bf16.msra.mxu0 %v1450
    %1973 = vmatpush.bf16.msra.mxu0 %v1446
    %1974 = vmatmul.bf16.gmra.mxu0 %v244
    %v1975 = vpop.f32.mrf.mxu0
    %v1976 = vadd.f32 %v1963, %v1975
    %v1977 = vpop.f32.mrf.mxu0
    %1978 = vdwg.mxu0
    %1979 = vmatpush.bf16.msra.mxu0 %v1506
    %1980 = vmatpush.bf16.msra.mxu0 %v1502
    %1981 = vmatpush.bf16.msra.mxu0 %v1498
    %1982 = vmatpush.bf16.msra.mxu0 %v1494
    %1983 = vmatpush.bf16.msra.mxu0 %v1490
    %1984 = vmatpush.bf16.msra.mxu0 %v1486
    %1985 = vmatpush.bf16.msra.mxu0 %v1482
    %1986 = vmatpush.bf16.msra.mxu0 %v1478
    %1987 = vmatmul.bf16.gmra.mxu0 %v245
    %v1988 = vpop.f32.mrf.mxu0
    %v1989 = vadd.f32 %v1976, %v1988
    %v1990 = vpop.f32.mrf.mxu0
    %1991 = vdwg.mxu0
    %1992 = vmatpush.bf16.msra.mxu0 %v1538
    %1993 = vmatpush.bf16.msra.mxu0 %v1534
    %1994 = vmatpush.bf16.msra.mxu0 %v1530
    %1995 = vmatpush.bf16.msra.mxu0 %v1526
    %1996 = vmatpush.bf16.msra.mxu0 %v1522
    %1997 = vmatpush.bf16.msra.mxu0 %v1518
    %1998 = vmatpush.bf16.msra.mxu0 %v1514
    %1999 = vmatpush.bf16.msra.mxu0 %v1510
    %2000 = vmatmul.bf16.gmra.mxu0 %v246
    %v2001 = vpop.f32.mrf.mxu0
    %v2002 = vadd.f32 %v1989, %v2001
    %v2003 = vpop.f32.mrf.mxu0
    %2004 = vdwg.mxu0
    %2005 = vmatpush.bf16.msra.mxu0 %v1315
    %2006 = vmatpush.bf16.msra.mxu0 %v1311
    %2007 = vmatpush.bf16.msra.mxu0 %v1307
    %2008 = vmatpush.bf16.msra.mxu0 %v1303
    %2009 = vmatpush.bf16.msra.mxu0 %v1299
    %2010 = vmatpush.bf16.msra.mxu0 %v1295
    %2011 = vmatpush.bf16.msra.mxu0 %v1291
    %2012 = vmatpush.bf16.msra.mxu0 %v1287
    %2013 = vmatmul.bf16.gmra.mxu0 %v239
    %v2014 = vpop.f32.mrf.mxu0
    %v2015 = vadd.f32 %v515, %v2014
    %v2016 = vpop.f32.mrf.mxu0
    %2017 = vdwg.mxu0
    %2018 = vmatpush.bf16.msra.mxu0 %v1347
    %2019 = vmatpush.bf16.msra.mxu0 %v1343
    %2020 = vmatpush.bf16.msra.mxu0 %v1339
    %2021 = vmatpush.bf16.msra.mxu0 %v1335
    %2022 = vmatpush.bf16.msra.mxu0 %v1331
    %2023 = vmatpush.bf16.msra.mxu0 %v1327
    %2024 = vmatpush.bf16.msra.mxu0 %v1323
    %2025 = vmatpush.bf16.msra.mxu0 %v1319
    %2026 = vmatmul.bf16.gmra.mxu0 %v240
    %v2027 = vpop.f32.mrf.mxu0
    %v2028 = vadd.f32 %v2015, %v2027
    %v2029 = vpop.f32.mrf.mxu0
    %2030 = vdwg.mxu0
    %2031 = vmatpush.bf16.msra.mxu0 %v1379
    %2032 = vmatpush.bf16.msra.mxu0 %v1375
    %2033 = vmatpush.bf16.msra.mxu0 %v1371
    %2034 = vmatpush.bf16.msra.mxu0 %v1367
    %2035 = vmatpush.bf16.msra.mxu0 %v1363
    %2036 = vmatpush.bf16.msra.mxu0 %v1359
    %2037 = vmatpush.bf16.msra.mxu0 %v1355
    %2038 = vmatpush.bf16.msra.mxu0 %v1351
    %2039 = vmatmul.bf16.gmra.mxu0 %v241
    %v2040 = vpop.f32.mrf.mxu0
    %v2041 = vadd.f32 %v2028, %v2040
    %v2042 = vpop.f32.mrf.mxu0
    %2043 = vdwg.mxu0
    %2044 = vmatpush.bf16.msra.mxu0 %v1411
    %2045 = vmatpush.bf16.msra.mxu0 %v1407
    %2046 = vmatpush.bf16.msra.mxu0 %v1403
    %2047 = vmatpush.bf16.msra.mxu0 %v1399
    %2048 = vmatpush.bf16.msra.mxu0 %v1395
    %2049 = vmatpush.bf16.msra.mxu0 %v1391
    %2050 = vmatpush.bf16.msra.mxu0 %v1387
    %2051 = vmatpush.bf16.msra.mxu0 %v1383
    %2052 = vmatmul.bf16.gmra.mxu0 %v242
    %v2053 = vpop.f32.mrf.mxu0
    %v2054 = vadd.f32 %v2041, %v2053
    %v2055 = vpop.f32.mrf.mxu0
    %2056 = vdwg.mxu0
    %2057 = vmatpush.bf16.msra.mxu0 %v1443
    %2058 = vmatpush.bf16.msra.mxu0 %v1439
    %2059 = vmatpush.bf16.msra.mxu0 %v1435
    %2060 = vmatpush.bf16.msra.mxu0 %v1431
    %2061 = vmatpush.bf16.msra.mxu0 %v1427
    %2062 = vmatpush.bf16.msra.mxu0 %v1423
    %2063 = vmatpush.bf16.msra.mxu0 %v1419
    %2064 = vmatpush.bf16.msra.mxu0 %v1415
    %2065 = vmatmul.bf16.gmra.mxu0 %v243
    %v2066 = vpop.f32.mrf.mxu0
    %v2067 = vadd.f32 %v2054, %v2066
    %v2068 = vpop.f32.mrf.mxu0
    %2069 = vdwg.mxu0
    %2070 = vmatpush.bf16.msra.mxu0 %v1475
    %2071 = vmatpush.bf16.msra.mxu0 %v1471
    %2072 = vmatpush.bf16.msra.mxu0 %v1467
    %2073 = vmatpush.bf16.msra.mxu0 %v1463
    %2074 = vmatpush.bf16.msra.mxu0 %v1459
    %2075 = vmatpush.bf16.msra.mxu0 %v1455
    %2076 = vmatpush.bf16.msra.mxu0 %v1451
    %2077 = vmatpush.bf16.msra.mxu0 %v1447
    %2078 = vmatmul.bf16.gmra.mxu0 %v244
    %v2079 = vpop.f32.mrf.mxu0
    %v2080 = vadd.f32 %v2067, %v2079
    %v2081 = vpop.f32.mrf.mxu0
    %2082 = vdwg.mxu0
    %2083 = vmatpush.bf16.msra.mxu0 %v1507
    %2084 = vmatpush.bf16.msra.mxu0 %v1503
    %2085 = vmatpush.bf16.msra.mxu0 %v1499
    %2086 = vmatpush.bf16.msra.mxu0 %v1495
    %2087 = vmatpush.bf16.msra.mxu0 %v1491
    %2088 = vmatpush.bf16.msra.mxu0 %v1487
    %2089 = vmatpush.bf16.msra.mxu0 %v1483
    %2090 = vmatpush.bf16.msra.mxu0 %v1479
    %2091 = vmatmul.bf16.gmra.mxu0 %v245
    %v2092 = vpop.f32.mrf.mxu0
    %v2093 = vadd.f32 %v2080, %v2092
    %v2094 = vpop.f32.mrf.mxu0
    %2095 = vdwg.mxu0
    %2096 = vmatpush.bf16.msra.mxu0 %v1539
    %2097 = vmatpush.bf16.msra.mxu0 %v1535
    %2098 = vmatpush.bf16.msra.mxu0 %v1531
    %2099 = vmatpush.bf16.msra.mxu0 %v1527
    %2100 = vmatpush.bf16.msra.mxu0 %v1523
    %2101 = vmatpush.bf16.msra.mxu0 %v1519
    %2102 = vmatpush.bf16.msra.mxu0 %v1515
    %2103 = vmatpush.bf16.msra.mxu0 %v1511
    %2104 = vmatmul.bf16.gmra.mxu0 %v246
    %v2105 = vpop.f32.mrf.mxu0
    %v2106 = vadd.f32 %v2093, %v2105
    %v2107 = vpop.f32.mrf.mxu0
    %2108 = vdwg.mxu0
    %2109 = vmatpush.bf16.msra.mxu0 %v1316
    %2110 = vmatpush.bf16.msra.mxu0 %v1312
    %2111 = vmatpush.bf16.msra.mxu0 %v1308
    %2112 = vmatpush.bf16.msra.mxu0 %v1304
    %2113 = vmatpush.bf16.msra.mxu0 %v1300
    %2114 = vmatpush.bf16.msra.mxu0 %v1296
    %2115 = vmatpush.bf16.msra.mxu0 %v1292
    %2116 = vmatpush.bf16.msra.mxu0 %v1288
    %2117 = vmatmul.bf16.gmra.mxu0 %v239
    %v2118 = vpop.f32.mrf.mxu0
    %v2119 = vadd.f32 %v516, %v2118
    %v2120 = vpop.f32.mrf.mxu0
    %2121 = vdwg.mxu0
    %2122 = vmatpush.bf16.msra.mxu0 %v1348
    %2123 = vmatpush.bf16.msra.mxu0 %v1344
    %2124 = vmatpush.bf16.msra.mxu0 %v1340
    %2125 = vmatpush.bf16.msra.mxu0 %v1336
    %2126 = vmatpush.bf16.msra.mxu0 %v1332
    %2127 = vmatpush.bf16.msra.mxu0 %v1328
    %2128 = vmatpush.bf16.msra.mxu0 %v1324
    %2129 = vmatpush.bf16.msra.mxu0 %v1320
    %2130 = vmatmul.bf16.gmra.mxu0 %v240
    %v2131 = vpop.f32.mrf.mxu0
    %v2132 = vadd.f32 %v2119, %v2131
    %v2133 = vpop.f32.mrf.mxu0
    %2134 = vdwg.mxu0
    %2135 = vmatpush.bf16.msra.mxu0 %v1380
    %2136 = vmatpush.bf16.msra.mxu0 %v1376
    %2137 = vmatpush.bf16.msra.mxu0 %v1372
    %2138 = vmatpush.bf16.msra.mxu0 %v1368
    %2139 = vmatpush.bf16.msra.mxu0 %v1364
    %2140 = vmatpush.bf16.msra.mxu0 %v1360
    %2141 = vmatpush.bf16.msra.mxu0 %v1356
    %2142 = vmatpush.bf16.msra.mxu0 %v1352
    %2143 = vmatmul.bf16.gmra.mxu0 %v241
    %v2144 = vpop.f32.mrf.mxu0
    %v2145 = vadd.f32 %v2132, %v2144
    %v2146 = vpop.f32.mrf.mxu0
    %2147 = vdwg.mxu0
    %2148 = vmatpush.bf16.msra.mxu0 %v1412
    %2149 = vmatpush.bf16.msra.mxu0 %v1408
    %2150 = vmatpush.bf16.msra.mxu0 %v1404
    %2151 = vmatpush.bf16.msra.mxu0 %v1400
    %2152 = vmatpush.bf16.msra.mxu0 %v1396
    %2153 = vmatpush.bf16.msra.mxu0 %v1392
    %2154 = vmatpush.bf16.msra.mxu0 %v1388
    %2155 = vmatpush.bf16.msra.mxu0 %v1384
    %2156 = vmatmul.bf16.gmra.mxu0 %v242
    %v2157 = vpop.f32.mrf.mxu0
    %v2158 = vadd.f32 %v2145, %v2157
    %v2159 = vpop.f32.mrf.mxu0
    %2160 = vdwg.mxu0
    %2161 = vmatpush.bf16.msra.mxu0 %v1444
    %2162 = vmatpush.bf16.msra.mxu0 %v1440
    %2163 = vmatpush.bf16.msra.mxu0 %v1436
    %2164 = vmatpush.bf16.msra.mxu0 %v1432
    %2165 = vmatpush.bf16.msra.mxu0 %v1428
    %2166 = vmatpush.bf16.msra.mxu0 %v1424
    %2167 = vmatpush.bf16.msra.mxu0 %v1420
    %2168 = vmatpush.bf16.msra.mxu0 %v1416
    %2169 = vmatmul.bf16.gmra.mxu0 %v243
    %v2170 = vpop.f32.mrf.mxu0
    %v2171 = vadd.f32 %v2158, %v2170
    %v2172 = vpop.f32.mrf.mxu0
    %2173 = vdwg.mxu0
    %2174 = vmatpush.bf16.msra.mxu0 %v1476
    %2175 = vmatpush.bf16.msra.mxu0 %v1472
    %2176 = vmatpush.bf16.msra.mxu0 %v1468
    %2177 = vmatpush.bf16.msra.mxu0 %v1464
    %2178 = vmatpush.bf16.msra.mxu0 %v1460
    %2179 = vmatpush.bf16.msra.mxu0 %v1456
    %2180 = vmatpush.bf16.msra.mxu0 %v1452
    %2181 = vmatpush.bf16.msra.mxu0 %v1448
    %2182 = vmatmul.bf16.gmra.mxu0 %v244
    %v2183 = vpop.f32.mrf.mxu0
    %v2184 = vadd.f32 %v2171, %v2183
    %v2185 = vpop.f32.mrf.mxu0
    %2186 = vdwg.mxu0
    %2187 = vmatpush.bf16.msra.mxu0 %v1508
    %2188 = vmatpush.bf16.msra.mxu0 %v1504
    %2189 = vmatpush.bf16.msra.mxu0 %v1500
    %2190 = vmatpush.bf16.msra.mxu0 %v1496
    %2191 = vmatpush.bf16.msra.mxu0 %v1492
    %2192 = vmatpush.bf16.msra.mxu0 %v1488
    %2193 = vmatpush.bf16.msra.mxu0 %v1484
    %2194 = vmatpush.bf16.msra.mxu0 %v1480
    %2195 = vmatmul.bf16.gmra.mxu0 %v245
    %v2196 = vpop.f32.mrf.mxu0
    %v2197 = vadd.f32 %v2184, %v2196
    %v2198 = vpop.f32.mrf.mxu0
    %2199 = vdwg.mxu0
    %2200 = vmatpush.bf16.msra.mxu0 %v1540
    %2201 = vmatpush.bf16.msra.mxu0 %v1536
    %2202 = vmatpush.bf16.msra.mxu0 %v1532
    %2203 = vmatpush.bf16.msra.mxu0 %v1528
    %2204 = vmatpush.bf16.msra.mxu0 %v1524
    %2205 = vmatpush.bf16.msra.mxu0 %v1520
    %2206 = vmatpush.bf16.msra.mxu0 %v1516
    %2207 = vmatpush.bf16.msra.mxu0 %v1512
    %2208 = vmatmul.bf16.gmra.mxu0 %v246
    %v2209 = vpop.f32.mrf.mxu0
    %v2210 = vadd.f32 %v2197, %v2209
    %v2211 = vpop.f32.mrf.mxu0
    %2212 = vdwg.mxu0
    %v2213 = vmax.f32 %v1898, 0.0
    %v2214 = vmax.f32 %v2002, 0.0
    %v2215 = vmax.f32 %v2106, 0.0
    %v2216 = vmax.f32 %v2210, 0.0
    %v2217 = vpack.c.bf16 %v2213, %v2213
    %v2218 = vpack.c.bf16 %v2214, %v2214
    %v2219 = vpack.c.bf16 %v2215, %v2215
    %v2220 = vpack.c.bf16 %v2216, %v2216
    %v2221 = vld [vmem:[%s4] sm:$0xf]
    %v2222 = vld [vmem:[%s4 + $0x4] sm:$0xf]
    %v2223 = vld [vmem:[%s4 + $0x8] sm:$0xf]
    %v2224 = vld [vmem:[%s4 + $0xc] sm:$0xf]
    %v2225 = vld [vmem:[%s4 + $0x10] sm:$0xf]
    %v2226 = vld [vmem:[%s4 + $0x14] sm:$0xf]
    %v2227 = vld [vmem:[%s4 + $0x18] sm:$0xf]
    %v2228 = vld [vmem:[%s4 + $0x1c] sm:$0xf]
    %v2229 = vld [vmem:[%s4 + $0x20] sm:$0xf]
    %v2230 = vld [vmem:[%s4 + $0x24] sm:$0xf]
    %v2231 = vld [vmem:[%s4 + $0x28] sm:$0xf]
    %v2232 = vld [vmem:[%s4 + $0x2c] sm:$0xf]
    %v2233 = vld [vmem:[%s4 + $0x30] sm:$0xf]
    %v2234 = vld [vmem:[%s4 + $0x34] sm:$0xf]
    %v2235 = vld [vmem:[%s4 + $0x38] sm:$0xf]
    %v2236 = vld [vmem:[%s4 + $0x3c] sm:$0xf]
    %v2237 = vld [vmem:[%s4 + $0x40] sm:$0xf]
    %v2238 = vld [vmem:[%s4 + $0x44] sm:$0xf]
    %v2239 = vld [vmem:[%s4 + $0x48] sm:$0xf]
    %v2240 = vld [vmem:[%s4 + $0x4c] sm:$0xf]
    %v2241 = vld [vmem:[%s4 + $0x50] sm:$0xf]
    %v2242 = vld [vmem:[%s4 + $0x54] sm:$0xf]
    %v2243 = vld [vmem:[%s4 + $0x58] sm:$0xf]
    %v2244 = vld [vmem:[%s4 + $0x5c] sm:$0xf]
    %v2245 = vld [vmem:[%s4 + $0x60] sm:$0xf]
    %v2246 = vld [vmem:[%s4 + $0x64] sm:$0xf]
    %v2247 = vld [vmem:[%s4 + $0x68] sm:$0xf]
    %v2248 = vld [vmem:[%s4 + $0x6c] sm:$0xf]
    %v2249 = vld [vmem:[%s4 + $0x70] sm:$0xf]
    %v2250 = vld [vmem:[%s4 + $0x74] sm:$0xf]
    %v2251 = vld [vmem:[%s4 + $0x78] sm:$0xf]
    %v2252 = vld [vmem:[%s4 + $0x7c] sm:$0xf]
    %v2253 = vld [vmem:[%s4 + $0x80] sm:$0xf]
    %v2254 = vld [vmem:[%s4 + $0x84] sm:$0xf]
    %v2255 = vld [vmem:[%s4 + $0x88] sm:$0xf]
    %v2256 = vld [vmem:[%s4 + $0x8c] sm:$0xf]
    %v2257 = vld [vmem:[%s4 + $0x90] sm:$0xf]
    %v2258 = vld [vmem:[%s4 + $0x94] sm:$0xf]
    %v2259 = vld [vmem:[%s4 + $0x98] sm:$0xf]
    %v2260 = vld [vmem:[%s4 + $0x9c] sm:$0xf]
    %v2261 = vld [vmem:[%s4 + $0xa0] sm:$0xf]
    %v2262 = vld [vmem:[%s4 + $0xa4] sm:$0xf]
    %v2263 = vld [vmem:[%s4 + $0xa8] sm:$0xf]
    %v2264 = vld [vmem:[%s4 + $0xac] sm:$0xf]
    %v2265 = vld [vmem:[%s4 + $0xb0] sm:$0xf]
    %v2266 = vld [vmem:[%s4 + $0xb4] sm:$0xf]
    %v2267 = vld [vmem:[%s4 + $0xb8] sm:$0xf]
    %v2268 = vld [vmem:[%s4 + $0xbc] sm:$0xf]
    %v2269 = vld [vmem:[%s4 + $0xc0] sm:$0xf]
    %v2270 = vld [vmem:[%s4 + $0xc4] sm:$0xf]
    %v2271 = vld [vmem:[%s4 + $0xc8] sm:$0xf]
    %v2272 = vld [vmem:[%s4 + $0xcc] sm:$0xf]
    %v2273 = vld [vmem:[%s4 + $0xd0] sm:$0xf]
    %v2274 = vld [vmem:[%s4 + $0xd4] sm:$0xf]
    %v2275 = vld [vmem:[%s4 + $0xd8] sm:$0xf]
    %v2276 = vld [vmem:[%s4 + $0xdc] sm:$0xf]
    %v2277 = vld [vmem:[%s4 + $0xe0] sm:$0xf]
    %v2278 = vld [vmem:[%s4 + $0xe4] sm:$0xf]
    %v2279 = vld [vmem:[%s4 + $0xe8] sm:$0xf]
    %v2280 = vld [vmem:[%s4 + $0xec] sm:$0xf]
    %v2281 = vld [vmem:[%s4 + $0xf0] sm:$0xf]
    %v2282 = vld [vmem:[%s4 + $0xf4] sm:$0xf]
    %v2283 = vld [vmem:[%s4 + $0xf8] sm:$0xf]
    %v2284 = vld [vmem:[%s4 + $0xfc] sm:$0xf]
    %v2285 = vpack.c.bf16 %v53, %v53
    %v2290 = vunpack.c.l.b16 %v45
    %v2291 = vunpack.c.l.b16 %v46
    %v2292 = vunpack.c.l.b16 %v47
    %v2293 = vunpack.c.l.b16 %v48
    %v2294 = vpack.c.b16 %v2291, %v2290
    %v2295 = vpack.c.b16 %v2293, %v2292
    %vm2298 = vcmask 261120
    %v2300 = vsel %vm2298, %v2285, 0
    %2302 = vmatpush.bf16.msra.mxu0 0
    %2303 = vmatpush.bf16.msra.mxu0 0
    %2304 = vmatpush.bf16.msra.mxu0 0
    %2305 = vmatpush.bf16.msra.mxu0 0
    %2306 = vmatpush.bf16.msra.mxu0 0
    %2307 = vmatpush.bf16.msra.mxu0 0
    %2308 = vmatpush.bf16.msra.mxu0 %v2295
    %2309 = vmatpush.bf16.msra.mxu0 %v2294
    %2310 = vmatmul.bf16.gmra.mxu0 %v2300
    %v2311 = vpop.f32.mrf.mxu0
    %v2312 = vadd.f32 0.0, %v2311
    %v2313 = vpop.f32.mrf.mxu0
    %2314 = vdwg.mxu0
    %v2379 = vunpack.c.l.b16 %v2221
    %v2380 = vunpack.c.l.b16 %v2222
    %v2381 = vunpack.c.l.b16 %v2223
    %v2382 = vunpack.c.l.b16 %v2224
    %v2383 = vunpack.c.l.b16 %v2225
    %v2384 = vunpack.c.l.b16 %v2226
    %v2385 = vunpack.c.l.b16 %v2227
    %v2386 = vunpack.c.l.b16 %v2228
    %v2387 = vunpack.c.l.b16 %v2229
    %v2388 = vunpack.c.l.b16 %v2230
    %v2389 = vunpack.c.l.b16 %v2231
    %v2390 = vunpack.c.l.b16 %v2232
    %v2391 = vunpack.c.l.b16 %v2233
    %v2392 = vunpack.c.l.b16 %v2234
    %v2393 = vunpack.c.l.b16 %v2235
    %v2394 = vunpack.c.l.b16 %v2236
    %v2395 = vunpack.c.l.b16 %v2237
    %v2396 = vunpack.c.l.b16 %v2238
    %v2397 = vunpack.c.l.b16 %v2239
    %v2398 = vunpack.c.l.b16 %v2240
    %v2399 = vunpack.c.l.b16 %v2241
    %v2400 = vunpack.c.l.b16 %v2242
    %v2401 = vunpack.c.l.b16 %v2243
    %v2402 = vunpack.c.l.b16 %v2244
    %v2403 = vunpack.c.l.b16 %v2245
    %v2404 = vunpack.c.l.b16 %v2246
    %v2405 = vunpack.c.l.b16 %v2247
    %v2406 = vunpack.c.l.b16 %v2248
    %v2407 = vunpack.c.l.b16 %v2249
    %v2408 = vunpack.c.l.b16 %v2250
    %v2409 = vunpack.c.l.b16 %v2251
    %v2410 = vunpack.c.l.b16 %v2252
    %v2411 = vunpack.c.l.b16 %v2253
    %v2412 = vunpack.c.l.b16 %v2254
    %v2413 = vunpack.c.l.b16 %v2255
    %v2414 = vunpack.c.l.b16 %v2256
    %v2415 = vunpack.c.l.b16 %v2257
    %v2416 = vunpack.c.l.b16 %v2258
    %v2417 = vunpack.c.l.b16 %v2259
    %v2418 = vunpack.c.l.b16 %v2260
    %v2419 = vunpack.c.l.b16 %v2261
    %v2420 = vunpack.c.l.b16 %v2262
    %v2421 = vunpack.c.l.b16 %v2263
    %v2422 = vunpack.c.l.b16 %v2264
    %v2423 = vunpack.c.l.b16 %v2265
    %v2424 = vunpack.c.l.b16 %v2266
    %v2425 = vunpack.c.l.b16 %v2267
    %v2426 = vunpack.c.l.b16 %v2268
    %v2427 = vunpack.c.l.b16 %v2269
    %v2428 = vunpack.c.l.b16 %v2270
    %v2429 = vunpack.c.l.b16 %v2271
    %v2430 = vunpack.c.l.b16 %v2272
    %v2431 = vunpack.c.l.b16 %v2273
    %v2432 = vunpack.c.l.b16 %v2274
    %v2433 = vunpack.c.l.b16 %v2275
    %v2434 = vunpack.c.l.b16 %v2276
    %v2435 = vunpack.c.l.b16 %v2277
    %v2436 = vunpack.c.l.b16 %v2278
    %v2437 = vunpack.c.l.b16 %v2279
    %v2438 = vunpack.c.l.b16 %v2280
    %v2439 = vunpack.c.l.b16 %v2281
    %v2440 = vunpack.c.l.b16 %v2282
    %v2441 = vunpack.c.l.b16 %v2283
    %v2442 = vunpack.c.l.b16 %v2284
    %v2443 = vpack.c.b16 %v2380, %v2379
    %v2444 = vpack.c.b16 %v2382, %v2381
    %v2445 = vpack.c.b16 %v2384, %v2383
    %v2446 = vpack.c.b16 %v2386, %v2385
    %v2447 = vpack.c.b16 %v2388, %v2387
    %v2448 = vpack.c.b16 %v2390, %v2389
    %v2449 = vpack.c.b16 %v2392, %v2391
    %v2450 = vpack.c.b16 %v2394, %v2393
    %v2451 = vpack.c.b16 %v2396, %v2395
    %v2452 = vpack.c.b16 %v2398, %v2397
    %v2453 = vpack.c.b16 %v2400, %v2399
    %v2454 = vpack.c.b16 %v2402, %v2401
    %v2455 = vpack.c.b16 %v2404, %v2403
    %v2456 = vpack.c.b16 %v2406, %v2405
    %v2457 = vpack.c.b16 %v2408, %v2407
    %v2458 = vpack.c.b16 %v2410, %v2409
    %v2459 = vpack.c.b16 %v2412, %v2411
    %v2460 = vpack.c.b16 %v2414, %v2413
    %v2461 = vpack.c.b16 %v2416, %v2415
    %v2462 = vpack.c.b16 %v2418, %v2417
    %v2463 = vpack.c.b16 %v2420, %v2419
    %v2464 = vpack.c.b16 %v2422, %v2421
    %v2465 = vpack.c.b16 %v2424, %v2423
    %v2466 = vpack.c.b16 %v2426, %v2425
    %v2467 = vpack.c.b16 %v2428, %v2427
    %v2468 = vpack.c.b16 %v2430, %v2429
    %v2469 = vpack.c.b16 %v2432, %v2431
    %v2470 = vpack.c.b16 %v2434, %v2433
    %v2471 = vpack.c.b16 %v2436, %v2435
    %v2472 = vpack.c.b16 %v2438, %v2437
    %v2473 = vpack.c.b16 %v2440, %v2439
    %v2474 = vpack.c.b16 %v2442, %v2441
    %2507 = vmatpush.bf16.msra.mxu0 %v2450
    %2508 = vmatpush.bf16.msra.mxu0 %v2449
    %2509 = vmatpush.bf16.msra.mxu0 %v2448
    %2510 = vmatpush.bf16.msra.mxu0 %v2447
    %2511 = vmatpush.bf16.msra.mxu0 %v2446
    %2512 = vmatpush.bf16.msra.mxu0 %v2445
    %2513 = vmatpush.bf16.msra.mxu0 %v2444
    %2514 = vmatpush.bf16.msra.mxu0 %v2443
    %2515 = vmatmul.bf16.gmra.mxu0 %v2217
    %v2516 = vpop.f32.mrf.mxu0
    %v2517 = vadd.f32 %v2312, %v2516
    %v2518 = vpop.f32.mrf.mxu0
    %2519 = vdwg.mxu0
    %2520 = vmatpush.bf16.msra.mxu0 %v2458
    %2521 = vmatpush.bf16.msra.mxu0 %v2457
    %2522 = vmatpush.bf16.msra.mxu0 %v2456
    %2523 = vmatpush.bf16.msra.mxu0 %v2455
    %2524 = vmatpush.bf16.msra.mxu0 %v2454
    %2525 = vmatpush.bf16.msra.mxu0 %v2453
    %2526 = vmatpush.bf16.msra.mxu0 %v2452
    %2527 = vmatpush.bf16.msra.mxu0 %v2451
    %2528 = vmatmul.bf16.gmra.mxu0 %v2218
    %v2529 = vpop.f32.mrf.mxu0
    %v2530 = vadd.f32 %v2517, %v2529
    %v2531 = vpop.f32.mrf.mxu0
    %2532 = vdwg.mxu0
    %2533 = vmatpush.bf16.msra.mxu0 %v2466
    %2534 = vmatpush.bf16.msra.mxu0 %v2465
    %2535 = vmatpush.bf16.msra.mxu0 %v2464
    %2536 = vmatpush.bf16.msra.mxu0 %v2463
    %2537 = vmatpush.bf16.msra.mxu0 %v2462
    %2538 = vmatpush.bf16.msra.mxu0 %v2461
    %2539 = vmatpush.bf16.msra.mxu0 %v2460
    %2540 = vmatpush.bf16.msra.mxu0 %v2459
    %2541 = vmatmul.bf16.gmra.mxu0 %v2219
    %v2542 = vpop.f32.mrf.mxu0
    %v2543 = vadd.f32 %v2530, %v2542
    %v2544 = vpop.f32.mrf.mxu0
    %2545 = vdwg.mxu0
    %2546 = vmatpush.bf16.msra.mxu0 %v2474
    %2547 = vmatpush.bf16.msra.mxu0 %v2473
    %2548 = vmatpush.bf16.msra.mxu0 %v2472
    %2549 = vmatpush.bf16.msra.mxu0 %v2471
    %2550 = vmatpush.bf16.msra.mxu0 %v2470
    %2551 = vmatpush.bf16.msra.mxu0 %v2469
    %2552 = vmatpush.bf16.msra.mxu0 %v2468
    %2553 = vmatpush.bf16.msra.mxu0 %v2467
    %2554 = vmatmul.bf16.gmra.mxu0 %v2220
    %v2555 = vpop.f32.mrf.mxu0
    %v2556 = vadd.f32 %v2543, %v2555
    %v2557 = vpop.f32.mrf.mxu0
    %2558 = vdwg.mxu0
    %v2559 = vperm.slane %v43, 2
    %v2560 = vadd.f32 %v2556, %v2559
    %v2561 = vmul.f32 %v2560, 0.5
    %v2562 = vtanh.pop %v2561
    %v2563 = vadd.f32 %v2562, 1.0
    %v2564 = vmul.f32 %v2563, 0.5
    %v2565 = vtanh.pop %v2560
    %v2566 = vmul.f32 %v2564, %v53
    %2568 = vrot.lane.b32.xlu0 %v2565, 64
    %v2569 = vpop.permute.xlu0 %2568
    %v2571 = vmul.f32 %v2564, %v2569
    %2573 = vrot.lane.b32.xlu0 %v2571, 32
    %v2574 = vpop.permute.xlu0 %2573
    %v2576 = vadd.f32 %v2566, %v2574
    %v2577 = vtanh.pop %v2576
    %2579 = vrot.lane.b32.xlu0 %v2577, 64
    %v2580 = vpop.permute.xlu0 %2579
    %v2582 = vmul.f32 %v2564, %v2580
    %v2583 = vpack.c.bf16 %v2582, %v2582
    %v2584 = vperm.slane %v43, 3
    %2586 = vrot.lane.b32.xlu0 %v2583, 32
    %v2587 = vpop.permute.xlu0 %2586
    %v2592 = vunpack.c.l.b16 %v49
    %v2593 = vunpack.c.l.b16 %v50
    %v2594 = vunpack.c.l.b16 %v51
    %v2595 = vunpack.c.l.b16 %v52
    %v2596 = vpack.c.b16 %v2593, %v2592
    %v2597 = vpack.c.b16 %v2595, %v2594
    %v2601 = vsel %vm2298, %v2587, 0
    %2603 = vmatpush.bf16.msra.mxu0 0
    %2604 = vmatpush.bf16.msra.mxu0 0
    %2605 = vmatpush.bf16.msra.mxu0 0
    %2606 = vmatpush.bf16.msra.mxu0 0
    %2607 = vmatpush.bf16.msra.mxu0 0
    %2608 = vmatpush.bf16.msra.mxu0 0
    %2609 = vmatpush.bf16.msra.mxu0 %v2597
    %2610 = vmatpush.bf16.msra.mxu0 %v2596
    %2611 = vmatmul.bf16.gmra.mxu0 %v2601
    %v2612 = vpop.f32.mrf.mxu0
    %v2613 = vadd.f32 %v2584, %v2612
    %v2614 = vpop.f32.mrf.mxu0
    %2615 = vdwg.mxu0
    %vm2616 = vcmask 41984
    %v2617 = vsel %vm2616, %v2613, -inf
    %2618 = vmax.xlane.f32.xlu0 %v2617
    %v2619 = vpop.xlane.xlu0 %2618
    %v2620 = vsub.f32 %v2613, %v2619
    %v2621 = vmul.f32 %v2620, 1.442695
    %v2622 = vpow.pop %v2621
    %v2623 = vsel %vm2616, %v2622, 0.0
    %2624 = vadd.xlane.f32.xlu0 %v2623
    %v2625 = vpop.xlane.xlu0 %2624
    %v2626 = vlog2.pop %v2625
    %v2627 = vmul.f32 %v2626, 0.6931472
    %v2628 = vsub.f32 %v2620, %v2627
    %v2629 = vrcp.pop %v2625
    %v2630 = vmul.f32 %v2625, %v2629
    %v2631 = vsub.f32 1.0, %v2630
    %v2632 = vmul.f32 %v2629, %v2631
    %v2633 = vadd.f32 %v2629, %v2632
    %vm2634 = vweird.f32 %v2625
    %vm2635 = vweird.f32 %v2629
    %vm2636 = vmor %vm2634, %vm2635
    %v2637 = vsel %vm2636, %v2629, %v2633
    %v2638 = vand.u32 2147483647, %v2625
    %vm2639 = vcmp.eq.f32.partialorder %v2638, 8.507059e+37
    %v2640 = vand.u32 %v2625, 2147483648
    %v2641 = vor.u32 1.1754944e-38, %v2640
    %v2642 = vsel %vm2639, %v2641, %v2637
    %v2643 = vmul.f32 %v2622, %v2642
    %v2644 = vmul.f32 %v2643, %v2628
    %v2645 = vsel %vm2616, %v2644, 0.0
    %2646 = vadd.xlane.f32.xlu0 %v2645
    %v2647 = vpop.xlane.xlu0 %2646
    %v2648 = vsub.f32 0.0, %v2647
    %2650 = vrot.lane.b32.xlu0 %v2582, 32
    %v2651 = vpop.permute.xlu0 %2650
    %2654 = vrot.lane.b32.xlu0 %v2643, 64
    %v2655 = vpop.permute.xlu0 %2654
    %2658 = vrot.lane.b32.xlu0 %v2628, 70
    %v2659 = vpop.permute.xlu0 %2658
    %2662 = vrot.lane.b32.xlu0 %v2613, 70
    %v2663 = vpop.permute.xlu0 %2662
    %v2665 = vsel %vm2298, %v2651, %v2576
    %vm2666 = vcmask 523264
    %v2667 = vsel %vm2666, %v2665, %v2655
    %vm2668 = vcmask 572416
    %v2669 = vsel %vm2668, %v2667, %v2659
    %vm2670 = vcmask 621568
    %v2671 = vsel %vm2670, %v2669, %v2663
    %vm2672 = vcmask 629760
    %v2673 = vsel %vm2672, %v2671, %v2648
    %vm2674 = vcmask 637952
    %v2675 = vsel %vm2674, %v2673, 0.0
    %2676 = vst [vmem:[%s7] sm:$0x3] %v2675
    // Predicated region
    $region34: #{a3c_forward.1} parent=1 // pred_check
      _
    $region35: #{a3c_forward.1} parent=1 // pred_check_branch
      %2678 = sbr.rel (0) target = $region37
    $region36: #{a3c_forward.1} parent=1 // pred_region
      _
    $region37: #{a3c_forward.1} parent=1 // pred_fallthru
      _
    // Predicated region
    $region38: #{a3c_forward.1} parent=1 // pred_check
      _
    $region39: #{a3c_forward.1} parent=1 // pred_check_branch
      %2680 = sbr.rel (0) target = $region41
    $region40: #{a3c_forward.1} parent=1 // pred_region
      _
    $region41: #{a3c_forward.1} parent=1 // pred_fallthru
      _
    %2681 = vsyncpa [#allocation3], 1

</llo_original>
